<compile_context>
chip_gen: v5e
topology: v5e:2x2
jax: 0.10.0
libtpu: 0.0.40
codegen_flags: <defaults>
</compile_context>

<pallas_src>
import functools
import math

import jax
import jax.numpy as jnp
from jax.experimental import pallas as pl
from jax.experimental.pallas import tpu as pltpu

BN_EPS = 1e-5
_VMEM_LIMIT = 32 * 1024 * 1024          # safe on v5e/v6e (128 MiB) and v7x (64 MiB)
_X_TILE_TARGET_BYTES = 4 * 1024 * 1024  # ~4 MiB x tiles (use ~8 MiB on v7x)
_BLOCKDIAG_MAX_BYTES = 4 * 1024 * 1024  # max resident block-diagonal weight
_PASS2_MAX_ROWS = 4096                  # ~2 MiB lane-dense pass-2 blocks


def _ceil_to(x, m):
    return -(-x // m) * m


def _plan_tiles(batch, genes, feat, x_tile_bytes):
    """Pick (batch tile, padded batch, lane-dense-pass-2?) for the streamed grid."""
    row_bytes = genes * feat * 4
    budget_rows = max(8, x_tile_bytes // row_bytes)
    # Tile granularity that makes the flattened pass-2 view lane-dense
    # (tile_rows * genes divisible by 1024 = 8 sublanes x 128 lanes).
    unit = max(8, 1024 // math.gcd(genes, 1024))
    base = _ceil_to(max(batch, 8), 8)
    # Only chase the lane-dense pass 2 if it fits the tile budget and does not
    # more than double the padded batch.
    use_unit = unit <= budget_rows and _ceil_to(base, unit) <= 2 * base
    step = unit if use_unit else 8
    tb = max(step, (budget_rows // step) * step)
    if tb >= base and base > step:
        # Would collapse to a single tile: keep >=2 tiles (megacore sharding on v7x).
        tb = _ceil_to((base + 1) // 2, step)
    tb = min(tb, _ceil_to(base, step))
    b_pad = _ceil_to(base, tb)
    dense = (tb * genes) % 1024 == 0 and (b_pad * genes) % 1024 == 0
    return tb, b_pad, dense


def _pick_pass2_rows(total_rows, max_rows):
    """Largest multiple-of-8 divisor of total_rows that is <= max_rows."""
    cap = min(total_rows, max_rows)
    d = cap - cap % 8
    while d >= 8:
        if total_rows % d == 0:
            return d
        d -= 8
    return total_rows


# ----------------------------- pass 1 kernels ------------------------------


def _emit_y_and_stats(y, i, batch, tile_rows, y_ref, part_ref):
    """Store y tile and masked per-tile (sum, sum_sq) partials."""
    y_ref[...] = y.astype(y_ref.dtype)
    row = jax.lax.broadcasted_iota(jnp.int32, y.shape, 0) + i * tile_rows
    ym = jnp.where(row < batch, y, 0.0)          # padded batch rows excluded
    s = jnp.sum(ym)
    ss = jnp.sum(ym * ym)
    sel = jax.lax.broadcasted_iota(jnp.int32, part_ref.shape, 1)  # (1, 2, 128)
    part_ref[...] = jnp.where(sel == 0, s, ss)   # row 0 = sum, row 1 = sum of squares


def _linear_tanh_stats_mxu_kernel(x_ref, w_ref, b_ref, y_ref, part_ref, *,
                                  batch, tile_rows):
    # x_ref: (TB, G*F) lane-dense  w_ref: (G*F, G) block-diagonal  b_ref: (1, G)
    i = pl.program_id(0)
    lin = jnp.dot(x_ref[...], w_ref[...],
                  precision=jax.lax.Precision.HIGHEST,
                  preferred_element_type=jnp.float32) + b_ref[...]
    y = jnp.tanh(lin)                            # (TB, G)
    _emit_y_and_stats(y, i, batch, tile_rows, y_ref, part_ref)


def _linear_tanh_stats_vpu_kernel(x_ref, w_ref, b_ref, y_ref, part_ref, *,
                                  batch, tile_rows):
    # Fallback for very large G (block-diagonal weight would not fit VMEM).
    # TODO(synk): this path keeps the F axis lane-padded; pad F to a multiple of
    #             128 (or supply x as (B, F, G)) for full speed at large G.
    i = pl.program_id(0)
    x = x_ref[...].astype(jnp.float32)           # (TB, G, F)
    w = w_ref[...].astype(jnp.float32)           # (G, F)
    lin = jnp.sum(x * w[None, :, :], axis=-1) + b_ref[...].astype(jnp.float32)
    y = jnp.tanh(lin)
    _emit_y_and_stats(y, i, batch, tile_rows, y_ref, part_ref)


# ----------------------------- pass 2 kernel -------------------------------


def _normalize_kernel(part_ref, y_ref, o_ref, *, inv_n):
    # part_ref: (nt, 2, 128) resident partials; combine them in-kernel (nt is tiny)
    # instead of a separate XLA op between the two pallas_calls.
    p = part_ref[...]
    lane0 = jax.lax.broadcasted_iota(jnp.int32, p.shape, 2) == 0
    row = jax.lax.broadcasted_iota(jnp.int32, p.shape, 1)
    total = jnp.sum(jnp.where(lane0 & (row == 0), p, 0.0))
    total_sq = jnp.sum(jnp.where(lane0 & (row == 1), p, 0.0))
    mean = total * inv_n
    # E[y^2]-mean^2 is safe here: tanh outputs are in (-1,1) and var is clamped >= 0.
    var = jnp.maximum(total_sq * inv_n - mean * mean, 0.0)
    inv_std = jax.lax.rsqrt(var + jnp.float32(BN_EPS))
    o_ref[...] = ((y_ref[...] - mean) * inv_std).astype(o_ref.dtype)


# --------------------------------- wrapper ---------------------------------


def complete_gene_module(x, weight, bias, *, tile_rows=None,
                         x_tile_bytes=_X_TILE_TARGET_BYTES, use_mxu=None):
    """x: (B, G, F); weight: (G, F); bias: (G,). Returns (B, G, 1) float32."""
    B, G, F = x.shape
    GF = G * F
    x = x.astype(jnp.float32)
    weight = weight.astype(jnp.float32)
    bias = bias.astype(jnp.float32)

    if tile_rows is None:
        TB, B_pad, dense = _plan_tiles(B, G, F, x_tile_bytes)
    else:
        TB = int(tile_rows)
        B_pad = _ceil_to(max(B, TB), TB)
        dense = (TB * G) % 1024 == 0 and (B_pad * G) % 1024 == 0
    nt = B_pad // TB

    if use_mxu is None:
        use_mxu = GF * G * 4 <= _BLOCKDIAG_MAX_BYTES

    bias2d = bias.reshape(1, G)
    cparams = pltpu.CompilerParams(
        dimension_semantics=("parallel",),       # megacore sharding on v7x
        vmem_limit_bytes=_VMEM_LIMIT,
    )

    out_shapes = (jax.ShapeDtypeStruct((B_pad, G), jnp.float32),
                  jax.ShapeDtypeStruct((nt, 2, 128), jnp.float32))
    out_specs = (pl.BlockSpec((TB, G), lambda i: (i, 0)),
                 pl.BlockSpec((1, 2, 128), lambda i: (i, 0, 0)))

    # ---- pass 1: linear (per-gene) + tanh + streaming BN partial stats ----
    if use_mxu:
        x_flat = x.reshape(B, GF)                              # free, contiguous
        if B_pad != B:
            x_flat = jnp.pad(x_flat, ((0, B_pad - B), (0, 0)))
        # Block-diagonal weight: w_bd[g*F + f, g] = weight[g, f]
        w_bd = (weight[:, :, None] *
                jnp.eye(G, dtype=jnp.float32)[:, None, :]).reshape(GF, G)
        kernel1 = functools.partial(_linear_tanh_stats_mxu_kernel,
                                    batch=B, tile_rows=TB)
        y, partials = pl.pallas_call(
            kernel1, out_shape=out_shapes, grid=(nt,),
            in_specs=[
                pl.BlockSpec((TB, GF), lambda i: (i, 0)),      # streamed, lane-dense
                pl.BlockSpec((GF, G), lambda i: (0, 0)),       # resident weights
                pl.BlockSpec((1, G), lambda i: (0, 0)),        # resident bias
            ],
            out_specs=out_specs, compiler_params=cparams,
        )(x_flat, w_bd, bias2d)
    else:
        x3 = x if B_pad == B else jnp.pad(x, ((0, B_pad - B), (0, 0), (0, 0)))
        kernel1 = functools.partial(_linear_tanh_stats_vpu_kernel,
                                    batch=B, tile_rows=TB)
        y, partials = pl.pallas_call(
            kernel1, out_shape=out_shapes, grid=(nt,),
            in_specs=[
                pl.BlockSpec((TB, G, F), lambda i: (i, 0, 0)),
                pl.BlockSpec((G, F), lambda i: (0, 0)),
                pl.BlockSpec((1, G), lambda i: (0, 0)),
            ],
            out_specs=out_specs, compiler_params=cparams,
        )(x3, weight, bias2d)

    # ---- pass 2: in-kernel stats combine + normalize (BatchNorm, train mode) ----
    kernel2 = functools.partial(_normalize_kernel, inv_n=1.0 / float(B * G))
    part_spec = pl.BlockSpec((nt, 2, 128), lambda i: (0, 0, 0))   # resident partials

    if dense:
        # Normalization is elementwise: process a lane-dense flattened view of the
        # contiguous y buffer (free reshape) -> unmasked full-lane loads/stores.
        R = (B_pad * G) // 128
        TR = _pick_pass2_rows(R, _PASS2_MAX_ROWS)
        y_norm = pl.pallas_call(
            kernel2,
            out_shape=jax.ShapeDtypeStruct((R, 128), jnp.float32),
            grid=(R // TR,),
            in_specs=[part_spec, pl.BlockSpec((TR, 128), lambda i: (i, 0))],
            out_specs=pl.BlockSpec((TR, 128), lambda i: (i, 0)),
            compiler_params=cparams,
        )(partials, y.reshape(R, 128)).reshape(B_pad, G)
    else:
        y_norm = pl.pallas_call(
            kernel2,
            out_shape=jax.ShapeDtypeStruct((B_pad, G), jnp.float32),
            grid=(nt,),
            in_specs=[part_spec, pl.BlockSpec((TB, G), lambda i: (i, 0))],
            out_specs=pl.BlockSpec((TB, G), lambda i: (i, 0)),
            compiler_params=cparams,
        )(partials, y)

    return y_norm[:B].reshape(B, G, 1)


def _reference(x, weight, bias):
    # Pure-JAX reference mirroring the PyTorch forward.
    lin = jnp.einsum("bgf,gf->bg", x, weight,
                     precision=jax.lax.Precision.HIGHEST) + bias[None, :]
    y = jnp.tanh(lin)
    mean = jnp.mean(y)
    var = jnp.mean((y - mean) ** 2)
    return ((y - mean) / jnp.sqrt(var + BN_EPS))[..., None]


if __name__ == "__main__":
    key = jax.random.PRNGKey(0)
    kx1, kx2, kx3, kw, kb = jax.random.split(key, 5)

    # Module-default hyper-params: num_genes=16, gene_feature_dim=32, gene_out_dim=1.
    G, F = 16, 32
    weight = jax.random.normal(kw, (G, F), dtype=jnp.float32)
    bias = jax.random.normal(kb, (G,), dtype=jnp.float32)

    def _check(x, **kwargs):
        out = jax.block_until_ready(complete_gene_module(x, weight, bias, **kwargs))
        ref = _reference(x, weight, bias)
        assert out.shape == ref.shape, (out.shape, ref.shape)
        err = float(jnp.max(jnp.abs(out - ref)))
        assert err < 1e-3, err

    # 1. Toy default shape (batch=4): single tile, lane-sparse pass-2 fallback.
    _check(jax.random.normal(kx1, (4, G, F), dtype=jnp.float32))

    # 2. Multi-tile path: padded batch, MXU block-diagonal pass 1,
    #    lane-dense flattened pass 2, >=2 grid tiles.
    _check(jax.random.normal(kx2, (200, G, F), dtype=jnp.float32))

    # 3. Elementwise pass-1 fallback, small tiles, masked padded-row stats.
    _check(jax.random.normal(kx3, (37, G, F), dtype=jnp.float32),
           tile_rows=8, use_mxu=False)

    print("KERNEL_OK")
</pallas_src>

<mosaic_0001>
module attributes {stable_mosaic.version = 11 : i64} {
  func.func @_linear_tanh_stats_mxu_kernel(%arg0: i32, %arg1: memref<8x512xf32, #tpu.memory_space<vmem>>, %arg2: memref<512x16xf32, #tpu.memory_space<vmem>>, %arg3: memref<1x16xf32, #tpu.memory_space<vmem>>, %arg4: memref<8x16xf32, #tpu.memory_space<vmem>>, %arg5: memref<1x2x128xf32, #tpu.memory_space<vmem>>) attributes {dimension_semantics = [#tpu.dimension_semantics<parallel>], iteration_bounds = array<i64: 1>, scalar_prefetch = 0 : i64, scratch_operands = 0 : i64, tpu.core_type = #tpu.core_type<tc>, window_params = [{transform_indices = @transform_0, window_bounds = array<i64: 8, 512>}, {pipeline_mode = #tpu.pipeline_mode<synchronous>, transform_indices = @transform_1, window_bounds = array<i64: 512, 16>}, {pipeline_mode = #tpu.pipeline_mode<synchronous>, transform_indices = @transform_2, window_bounds = array<i64: 1, 16>}, {transform_indices = @transform_3, window_bounds = array<i64: 8, 16>}, {transform_indices = @transform_4, window_bounds = array<i64: 1, 2, 128>}]} {
    %c0 = arith.constant 0 : index
    %c0_0 = arith.constant 0 : index
    %0 = vector.load %arg1[%c0, %c0_0] : memref<8x512xf32, #tpu.memory_space<vmem>>, vector<8x512xf32>
    %c0_1 = arith.constant 0 : index
    %c0_2 = arith.constant 0 : index
    %1 = vector.load %arg2[%c0_1, %c0_2] : memref<512x16xf32, #tpu.memory_space<vmem>>, vector<512x16xf32>
    %cst = arith.constant dense<0.000000e+00> : vector<8x16xf32>
    %2 = tpu.matmul %0, %1, %cst {dimension_numbers = #tpu.dot_dimension_numbers<[1], [0], [0], [1], [0, 0, 1, 1], [], []>, precision = #tpu.contract_precision<fp32>} : vector<8x512xf32>, vector<512x16xf32>, vector<8x16xf32> -> vector<8x16xf32>
    %c0_3 = arith.constant 0 : index
    %c0_4 = arith.constant 0 : index
    %3 = vector.load %arg3[%c0_3, %c0_4] : memref<1x16xf32, #tpu.memory_space<vmem>>, vector<1x16xf32>
    %4 = vector.broadcast %3 : vector<1x16xf32> to vector<8x16xf32>
    %5 = arith.addf %2, %4 : vector<8x16xf32>
    %6 = math.tanh %5 : vector<8x16xf32>
    %c0_5 = arith.constant 0 : index
    %c0_6 = arith.constant 0 : index
    %7 = vector.load %arg4[%c0_5, %c0_6] : memref<8x16xf32, #tpu.memory_space<vmem>>, vector<8x16xf32>
    tpu.vector_store %arg4[%c0_5, %c0_6], %6 {strides = array<i32>} : memref<8x16xf32, #tpu.memory_space<vmem>>, vector<8x16xf32>,
    %8 = tpu.iota {dimensions = array<i32: 0>} : vector<8x16xi32>
    %c8_i32 = arith.constant 8 : i32
    %9 = arith.muli %arg0, %c8_i32 : i32
    %10 = vector.broadcast %9 : i32 to vector<8x16xi32>
    %11 = arith.addi %8, %10 : vector<8x16xi32>
    %c4_i32 = arith.constant 4 : i32
    %12 = vector.broadcast %c4_i32 : i32 to vector<8x16xi32>
    %13 = arith.cmpi slt, %11, %12 : vector<8x16xi32>
    %cst_7 = arith.constant 0.000000e+00 : f32
    %14 = vector.broadcast %cst_7 : f32 to vector<8x16xf32>
    %15 = arith.select %13, %6, %14 : vector<8x16xi1>, vector<8x16xf32>
    %16 = vector.shape_cast %15 : vector<8x16xf32> to vector<1x8x16xf32>
    %cst_8 = arith.constant dense<0.000000e+00> : vector<1xf32>
    %17 = vector.multi_reduction <add>, %16, %cst_8 [1, 2] : vector<1x8x16xf32> to vector<1xf32>
    %18 = vector.shape_cast %17 : vector<1xf32> to vector<1x1x1xf32>
    %19 = vector.extract %18[0, 0, 0] : f32 from vector<1x1x1xf32>
    %20 = arith.mulf %15, %15 : vector<8x16xf32>
    %21 = vector.shape_cast %20 : vector<8x16xf32> to vector<1x8x16xf32>
    %cst_9 = arith.constant dense<0.000000e+00> : vector<1xf32>
    %22 = vector.multi_reduction <add>, %21, %cst_9 [1, 2] : vector<1x8x16xf32> to vector<1xf32>
    %23 = vector.shape_cast %22 : vector<1xf32> to vector<1x1x1xf32>
    %24 = vector.extract %23[0, 0, 0] : f32 from vector<1x1x1xf32>
    %25 = tpu.iota {dimensions = array<i32: 1>} : vector<1x2x128xi32>
    %c0_i32 = arith.constant 0 : i32
    %26 = vector.broadcast %c0_i32 : i32 to vector<1x2x128xi32>
    %27 = arith.cmpi eq, %25, %26 : vector<1x2x128xi32>
    %28 = vector.broadcast %19 : f32 to vector<1x2x128xf32>
    %29 = vector.broadcast %24 : f32 to vector<1x2x128xf32>
    %30 = arith.select %27, %28, %29 : vector<1x2x128xi1>, vector<1x2x128xf32>
    %c0_10 = arith.constant 0 : index
    %c0_11 = arith.constant 0 : index
    %c0_12 = arith.constant 0 : index
    %31 = vector.load %arg5[%c0_10, %c0_11, %c0_12] : memref<1x2x128xf32, #tpu.memory_space<vmem>>, vector<1x2x128xf32>
    tpu.vector_store %arg5[%c0_10, %c0_11, %c0_12], %30 {strides = array<i32>} : memref<1x2x128xf32, #tpu.memory_space<vmem>>, vector<1x2x128xf32>,
    return
  }
  func.func @transform_0(%arg0: i32) -> (i32, i32) {
    %c0_i32 = arith.constant 0 : i32
    %c0_i32_0 = arith.constant 0 : i32
    return %arg0, %c0_i32 : i32, i32
  }
  func.func @transform_1(%arg0: i32) -> (i32, i32) {
    %c0_i32 = arith.constant 0 : i32
    %c0_i32_0 = arith.constant 0 : i32
    %c0_i32_1 = arith.constant 0 : i32
    return %c0_i32, %c0_i32_0 : i32, i32
  }
  func.func @transform_2(%arg0: i32) -> (i32, i32) {
    %c0_i32 = arith.constant 0 : i32
    %c0_i32_0 = arith.constant 0 : i32
    %c0_i32_1 = arith.constant 0 : i32
    return %c0_i32, %c0_i32_0 : i32, i32
  }
  func.func @transform_3(%arg0: i32) -> (i32, i32) {
    %c0_i32 = arith.constant 0 : i32
    %c0_i32_0 = arith.constant 0 : i32
    return %arg0, %c0_i32 : i32, i32
  }
  func.func @transform_4(%arg0: i32) -> (i32, i32, i32) {
    %c0_i32 = arith.constant 0 : i32
    %c0_i32_0 = arith.constant 0 : i32
    %c0_i32_1 = arith.constant 0 : i32
    return %arg0, %c0_i32, %c0_i32_0 : i32, i32, i32
  }
}

</mosaic_0001>

<llo_original>
// kernel: tpu_custom_call.1
$region0: #{tpu_custom_call.1}
  #allocation0 [shape = 'u32[]', space=smem, size = 0x4, offset = 0x4, fixed_abs, tag = 'smem constant byte address 0x4 - core index']
  #allocation1 [shape = 'u32[72,128]{1,0:T(1,128)}', space=vmem, size = 0x9000, scoped, tag = 'internal scratch']
  %s0 = inlined_call_operand.vmem [shape: f32[8,512], index: 0, kind: input, shape index: {}]
  %s1 = inlined_call_operand.vmem [shape: f32[512,16], index: 1, kind: input, shape index: {}]
  %s2 = inlined_call_operand.vmem [shape: f32[1,16], index: 2, kind: input, shape index: {}]
  %s3 = inlined_call_operand.hbm [shape: f32[8,16], index: 3, kind: output, shape index: {0}]
  %s4 = inlined_call_operand.hbm [shape: f32[1,2,128], index: 4, kind: output, shape index: {1}]
  %5 = xla_tuple %s3, %s4
  %s6 = sld [smem:[#allocation0]]
  $region30: #{tpu_custom_call.1} parent=0
    _
  %s8 = ssub.s32 1, %s6
  %s9 = scalar_select 0, %s8, %s6
  $region1: #{tpu_custom_call.1} parent=0
    #allocation2 [shape = 'u8[4096]{0}', space=vmem, size = 0x1000, scoped, tag = 'output window, operand 0, single buffered']
    #allocation3 [shape = 's32[1]{0}', space=sflag, size = 0x4, scoped, tag = 'scoped memory for tpu_custom_call.1']
    #allocation4 [shape = 'u8[1024]{0}', space=vmem, size = 0x400, scoped, tag = 'output window, operand 1, single buffered']
    #allocation5 [shape = 's32[1]{0}', space=sflag, size = 0x4, scoped, tag = 'scoped memory for tpu_custom_call.1']
    %10 = vsyncpa [#allocation3], 0
    %11 = vsyncpa [#allocation5], 0
    // Predicated region
    $region2: #{tpu_custom_call.1} parent=1 // pred_check
      _
    $region3: #{tpu_custom_call.1} parent=1 // pred_check_branch
      %13 = sbr.rel (0) target = $region5
    $region4: #{tpu_custom_call.1} parent=1 // pred_region
      _
    $region5: #{tpu_custom_call.1} parent=1 // pred_fallthru
      _
    // Predicated region
    $region6: #{tpu_custom_call.1} parent=1 // pred_check
      _
    $region7: #{tpu_custom_call.1} parent=1 // pred_check_branch
      %15 = sbr.rel (0) target = $region9
    $region8: #{tpu_custom_call.1} parent=1 // pred_region
      _
    $region9: #{tpu_custom_call.1} parent=1 // pred_fallthru
      _
    // Predicated region
    $region10: #{tpu_custom_call.1} parent=1 // pred_check
      _
    $region11: #{tpu_custom_call.1} parent=1 // pred_check_branch
      %17 = sbr.rel (0) target = $region13
    $region12: #{tpu_custom_call.1} parent=1 // pred_region
      _
    $region13: #{tpu_custom_call.1} parent=1 // pred_fallthru
      _
    %v18 = vld [vmem:[%s0] sm:$0xff]
    %v19 = vld [vmem:[%s0 + $0x8] sm:$0xff]
    %v20 = vld [vmem:[%s0 + $0x10] sm:$0xff]
    %v21 = vld [vmem:[%s0 + $0x18] sm:$0xff]
    %v22 = vld [vmem:[%s1] sm:$0xff]
    %v23 = vld [vmem:[%s1 + $0x8] sm:$0xff]
    %v24 = vld [vmem:[%s1 + $0x10] sm:$0xff]
    %v25 = vld [vmem:[%s1 + $0x18] sm:$0xff]
    %v26 = vld [vmem:[%s1 + $0x20] sm:$0xff]
    %v27 = vld [vmem:[%s1 + $0x28] sm:$0xff]
    %v28 = vld [vmem:[%s1 + $0x30] sm:$0xff]
    %v29 = vld [vmem:[%s1 + $0x38] sm:$0xff]
    %v30 = vld [vmem:[%s1 + $0x40] sm:$0xff]
    %v31 = vld [vmem:[%s1 + $0x48] sm:$0xff]
    %v32 = vld [vmem:[%s1 + $0x50] sm:$0xff]
    %v33 = vld [vmem:[%s1 + $0x58] sm:$0xff]
    %v34 = vld [vmem:[%s1 + $0x60] sm:$0xff]
    %v35 = vld [vmem:[%s1 + $0x68] sm:$0xff]
    %v36 = vld [vmem:[%s1 + $0x70] sm:$0xff]
    %v37 = vld [vmem:[%s1 + $0x78] sm:$0xff]
    %v38 = vld [vmem:[%s1 + $0x80] sm:$0xff]
    %v39 = vld [vmem:[%s1 + $0x88] sm:$0xff]
    %v40 = vld [vmem:[%s1 + $0x90] sm:$0xff]
    %v41 = vld [vmem:[%s1 + $0x98] sm:$0xff]
    %v42 = vld [vmem:[%s1 + $0xa0] sm:$0xff]
    %v43 = vld [vmem:[%s1 + $0xa8] sm:$0xff]
    %v44 = vld [vmem:[%s1 + $0xb0] sm:$0xff]
    %v45 = vld [vmem:[%s1 + $0xb8] sm:$0xff]
    %v46 = vld [vmem:[%s1 + $0xc0] sm:$0xff]
    %v47 = vld [vmem:[%s1 + $0xc8] sm:$0xff]
    %v48 = vld [vmem:[%s1 + $0xd0] sm:$0xff]
    %v49 = vld [vmem:[%s1 + $0xd8] sm:$0xff]
    %v50 = vld [vmem:[%s1 + $0xe0] sm:$0xff]
    %v51 = vld [vmem:[%s1 + $0xe8] sm:$0xff]
    %v52 = vld [vmem:[%s1 + $0xf0] sm:$0xff]
    %v53 = vld [vmem:[%s1 + $0xf8] sm:$0xff]
    %v54 = vld [vmem:[%s1 + $0x100] sm:$0xff]
    %v55 = vld [vmem:[%s1 + $0x108] sm:$0xff]
    %v56 = vld [vmem:[%s1 + $0x110] sm:$0xff]
    %v57 = vld [vmem:[%s1 + $0x118] sm:$0xff]
    %v58 = vld [vmem:[%s1 + $0x120] sm:$0xff]
    %v59 = vld [vmem:[%s1 + $0x128] sm:$0xff]
    %v60 = vld [vmem:[%s1 + $0x130] sm:$0xff]
    %v61 = vld [vmem:[%s1 + $0x138] sm:$0xff]
    %v62 = vld [vmem:[%s1 + $0x140] sm:$0xff]
    %v63 = vld [vmem:[%s1 + $0x148] sm:$0xff]
    %v64 = vld [vmem:[%s1 + $0x150] sm:$0xff]
    %v65 = vld [vmem:[%s1 + $0x158] sm:$0xff]
    %v66 = vld [vmem:[%s1 + $0x160] sm:$0xff]
    %v67 = vld [vmem:[%s1 + $0x168] sm:$0xff]
    %v68 = vld [vmem:[%s1 + $0x170] sm:$0xff]
    %v69 = vld [vmem:[%s1 + $0x178] sm:$0xff]
    %v70 = vld [vmem:[%s1 + $0x180] sm:$0xff]
    %v71 = vld [vmem:[%s1 + $0x188] sm:$0xff]
    %v72 = vld [vmem:[%s1 + $0x190] sm:$0xff]
    %v73 = vld [vmem:[%s1 + $0x198] sm:$0xff]
    %v74 = vld [vmem:[%s1 + $0x1a0] sm:$0xff]
    %v75 = vld [vmem:[%s1 + $0x1a8] sm:$0xff]
    %v76 = vld [vmem:[%s1 + $0x1b0] sm:$0xff]
    %v77 = vld [vmem:[%s1 + $0x1b8] sm:$0xff]
    %v78 = vld [vmem:[%s1 + $0x1c0] sm:$0xff]
    %v79 = vld [vmem:[%s1 + $0x1c8] sm:$0xff]
    %v80 = vld [vmem:[%s1 + $0x1d0] sm:$0xff]
    %v81 = vld [vmem:[%s1 + $0x1d8] sm:$0xff]
    %v82 = vld [vmem:[%s1 + $0x1e0] sm:$0xff]
    %v83 = vld [vmem:[%s1 + $0x1e8] sm:$0xff]
    %v84 = vld [vmem:[%s1 + $0x1f0] sm:$0xff]
    %v85 = vld [vmem:[%s1 + $0x1f8] sm:$0xff]
    %v86 = vld [vmem:[%s2] sm:$0x1]
    %v88 = vperm.slane %v86, 0
    %v90 = vand.u32 %v37, 4294901760
    %91 = vmatpush.msra.mxu0 %v90
    %v92 = vand.u32 %v36, 4294901760
    %93 = vmatpush.msra.mxu0 %v92
    %v94 = vand.u32 %v35, 4294901760
    %95 = vmatpush.msra.mxu0 %v94
    %v96 = vand.u32 %v34, 4294901760
    %97 = vmatpush.msra.mxu0 %v96
    %v98 = vand.u32 %v33, 4294901760
    %99 = vmatpush.msra.mxu0 %v98
    %v100 = vand.u32 %v32, 4294901760
    %101 = vmatpush.msra.mxu0 %v100
    %v102 = vand.u32 %v31, 4294901760
    %103 = vmatpush.msra.mxu0 %v102
    %v104 = vand.u32 %v30, 4294901760
    %105 = vmatpush.msra.mxu0 %v104
    %v106 = vand.u32 %v29, 4294901760
    %107 = vmatpush.msra.mxu0 %v106
    %v108 = vand.u32 %v28, 4294901760
    %109 = vmatpush.msra.mxu0 %v108
    %v110 = vand.u32 %v27, 4294901760
    %111 = vmatpush.msra.mxu0 %v110
    %v112 = vand.u32 %v26, 4294901760
    %113 = vmatpush.msra.mxu0 %v112
    %v114 = vand.u32 %v25, 4294901760
    %115 = vmatpush.msra.mxu0 %v114
    %v116 = vand.u32 %v24, 4294901760
    %117 = vmatpush.msra.mxu0 %v116
    %v118 = vand.u32 %v23, 4294901760
    %119 = vmatpush.msra.mxu0 %v118
    %v120 = vand.u32 %v22, 4294901760
    %121 = vmatpush.msra.mxu0 %v120
    %v122 = vand.u32 %v18, 4294901760
    %v123 = vsub.f32 %v18, %v122
    %v124 = vand.u32 %v123, 4294901760
    %v125 = vsub.f32 %v123, %v124
    %v126 = vand.u32 %v125, 4294901760
    %127 = vmatmul.f32.gmra.mxu0 %v126
    %v128 = vpop.f32.mrf.mxu0
    %v129 = vadd.f32 %v88, %v128
    %130 = vdwg.mxu0
    %v131 = vand.u32 %v37, 4294901760
    %v132 = vsub.f32 %v37, %v131
    %v133 = vand.u32 %v132, 4294901760
    %v134 = vsub.f32 %v132, %v133
    %v135 = vand.u32 %v134, 4294901760
    %136 = vmatpush.msra.mxu0 %v135
    %v137 = vand.u32 %v36, 4294901760
    %v138 = vsub.f32 %v36, %v137
    %v139 = vand.u32 %v138, 4294901760
    %v140 = vsub.f32 %v138, %v139
    %v141 = vand.u32 %v140, 4294901760
    %142 = vmatpush.msra.mxu0 %v141
    %v143 = vand.u32 %v35, 4294901760
    %v144 = vsub.f32 %v35, %v143
    %v145 = vand.u32 %v144, 4294901760
    %v146 = vsub.f32 %v144, %v145
    %v147 = vand.u32 %v146, 4294901760
    %148 = vmatpush.msra.mxu0 %v147
    %v149 = vand.u32 %v34, 4294901760
    %v150 = vsub.f32 %v34, %v149
    %v151 = vand.u32 %v150, 4294901760
    %v152 = vsub.f32 %v150, %v151
    %v153 = vand.u32 %v152, 4294901760
    %154 = vmatpush.msra.mxu0 %v153
    %v155 = vand.u32 %v33, 4294901760
    %v156 = vsub.f32 %v33, %v155
    %v157 = vand.u32 %v156, 4294901760
    %v158 = vsub.f32 %v156, %v157
    %v159 = vand.u32 %v158, 4294901760
    %160 = vmatpush.msra.mxu0 %v159
    %v161 = vand.u32 %v32, 4294901760
    %v162 = vsub.f32 %v32, %v161
    %v163 = vand.u32 %v162, 4294901760
    %v164 = vsub.f32 %v162, %v163
    %v165 = vand.u32 %v164, 4294901760
    %166 = vmatpush.msra.mxu0 %v165
    %v167 = vand.u32 %v31, 4294901760
    %v168 = vsub.f32 %v31, %v167
    %v169 = vand.u32 %v168, 4294901760
    %v170 = vsub.f32 %v168, %v169
    %v171 = vand.u32 %v170, 4294901760
    %172 = vmatpush.msra.mxu0 %v171
    %v173 = vand.u32 %v30, 4294901760
    %v174 = vsub.f32 %v30, %v173
    %v175 = vand.u32 %v174, 4294901760
    %v176 = vsub.f32 %v174, %v175
    %v177 = vand.u32 %v176, 4294901760
    %178 = vmatpush.msra.mxu0 %v177
    %v179 = vand.u32 %v29, 4294901760
    %v180 = vsub.f32 %v29, %v179
    %v181 = vand.u32 %v180, 4294901760
    %v182 = vsub.f32 %v180, %v181
    %v183 = vand.u32 %v182, 4294901760
    %184 = vmatpush.msra.mxu0 %v183
    %v185 = vand.u32 %v28, 4294901760
    %v186 = vsub.f32 %v28, %v185
    %v187 = vand.u32 %v186, 4294901760
    %v188 = vsub.f32 %v186, %v187
    %v189 = vand.u32 %v188, 4294901760
    %190 = vmatpush.msra.mxu0 %v189
    %v191 = vand.u32 %v27, 4294901760
    %v192 = vsub.f32 %v27, %v191
    %v193 = vand.u32 %v192, 4294901760
    %v194 = vsub.f32 %v192, %v193
    %v195 = vand.u32 %v194, 4294901760
    %196 = vmatpush.msra.mxu0 %v195
    %v197 = vand.u32 %v26, 4294901760
    %v198 = vsub.f32 %v26, %v197
    %v199 = vand.u32 %v198, 4294901760
    %v200 = vsub.f32 %v198, %v199
    %v201 = vand.u32 %v200, 4294901760
    %202 = vmatpush.msra.mxu0 %v201
    %v203 = vand.u32 %v25, 4294901760
    %v204 = vsub.f32 %v25, %v203
    %v205 = vand.u32 %v204, 4294901760
    %v206 = vsub.f32 %v204, %v205
    %v207 = vand.u32 %v206, 4294901760
    %208 = vmatpush.msra.mxu0 %v207
    %v209 = vand.u32 %v24, 4294901760
    %v210 = vsub.f32 %v24, %v209
    %v211 = vand.u32 %v210, 4294901760
    %v212 = vsub.f32 %v210, %v211
    %v213 = vand.u32 %v212, 4294901760
    %214 = vmatpush.msra.mxu0 %v213
    %v215 = vand.u32 %v23, 4294901760
    %v216 = vsub.f32 %v23, %v215
    %v217 = vand.u32 %v216, 4294901760
    %v218 = vsub.f32 %v216, %v217
    %v219 = vand.u32 %v218, 4294901760
    %220 = vmatpush.msra.mxu0 %v219
    %v221 = vand.u32 %v22, 4294901760
    %v222 = vsub.f32 %v22, %v221
    %v223 = vand.u32 %v222, 4294901760
    %v224 = vsub.f32 %v222, %v223
    %v225 = vand.u32 %v224, 4294901760
    %226 = vmatpush.msra.mxu0 %v225
    %v227 = vand.u32 %v18, 4294901760
    %228 = vmatmul.f32.gmra.mxu0 %v227
    %v229 = vpop.f32.mrf.mxu0
    %v230 = vadd.f32 %v129, %v229
    %231 = vdwg.mxu0
    %v232 = vand.u32 %v37, 4294901760
    %v233 = vsub.f32 %v37, %v232
    %234 = vmatpush.msra.mxu0 %v233
    %v235 = vand.u32 %v36, 4294901760
    %v236 = vsub.f32 %v36, %v235
    %237 = vmatpush.msra.mxu0 %v236
    %v238 = vand.u32 %v35, 4294901760
    %v239 = vsub.f32 %v35, %v238
    %240 = vmatpush.msra.mxu0 %v239
    %v241 = vand.u32 %v34, 4294901760
    %v242 = vsub.f32 %v34, %v241
    %243 = vmatpush.msra.mxu0 %v242
    %v244 = vand.u32 %v33, 4294901760
    %v245 = vsub.f32 %v33, %v244
    %246 = vmatpush.msra.mxu0 %v245
    %v247 = vand.u32 %v32, 4294901760
    %v248 = vsub.f32 %v32, %v247
    %249 = vmatpush.msra.mxu0 %v248
    %v250 = vand.u32 %v31, 4294901760
    %v251 = vsub.f32 %v31, %v250
    %252 = vmatpush.msra.mxu0 %v251
    %v253 = vand.u32 %v30, 4294901760
    %v254 = vsub.f32 %v30, %v253
    %255 = vmatpush.msra.mxu0 %v254
    %v256 = vand.u32 %v29, 4294901760
    %v257 = vsub.f32 %v29, %v256
    %258 = vmatpush.msra.mxu0 %v257
    %v259 = vand.u32 %v28, 4294901760
    %v260 = vsub.f32 %v28, %v259
    %261 = vmatpush.msra.mxu0 %v260
    %v262 = vand.u32 %v27, 4294901760
    %v263 = vsub.f32 %v27, %v262
    %264 = vmatpush.msra.mxu0 %v263
    %v265 = vand.u32 %v26, 4294901760
    %v266 = vsub.f32 %v26, %v265
    %267 = vmatpush.msra.mxu0 %v266
    %v268 = vand.u32 %v25, 4294901760
    %v269 = vsub.f32 %v25, %v268
    %270 = vmatpush.msra.mxu0 %v269
    %v271 = vand.u32 %v24, 4294901760
    %v272 = vsub.f32 %v24, %v271
    %273 = vmatpush.msra.mxu0 %v272
    %v274 = vand.u32 %v23, 4294901760
    %v275 = vsub.f32 %v23, %v274
    %276 = vmatpush.msra.mxu0 %v275
    %v277 = vand.u32 %v22, 4294901760
    %v278 = vsub.f32 %v22, %v277
    %279 = vmatpush.msra.mxu0 %v278
    %v280 = vand.u32 %v18, 4294901760
    %v281 = vsub.f32 %v18, %v280
    %282 = vmatmul.f32.gmra.mxu0 %v281
    %v283 = vpop.f32.mrf.mxu0
    %v284 = vadd.f32 %v230, %v283
    %285 = vdwg.mxu0
    %v286 = vand.u32 %v37, 4294901760
    %287 = vmatpush.msra.mxu0 %v286
    %v288 = vand.u32 %v36, 4294901760
    %289 = vmatpush.msra.mxu0 %v288
    %v290 = vand.u32 %v35, 4294901760
    %291 = vmatpush.msra.mxu0 %v290
    %v292 = vand.u32 %v34, 4294901760
    %293 = vmatpush.msra.mxu0 %v292
    %v294 = vand.u32 %v33, 4294901760
    %295 = vmatpush.msra.mxu0 %v294
    %v296 = vand.u32 %v32, 4294901760
    %297 = vmatpush.msra.mxu0 %v296
    %v298 = vand.u32 %v31, 4294901760
    %299 = vmatpush.msra.mxu0 %v298
    %v300 = vand.u32 %v30, 4294901760
    %301 = vmatpush.msra.mxu0 %v300
    %v302 = vand.u32 %v29, 4294901760
    %303 = vmatpush.msra.mxu0 %v302
    %v304 = vand.u32 %v28, 4294901760
    %305 = vmatpush.msra.mxu0 %v304
    %v306 = vand.u32 %v27, 4294901760
    %307 = vmatpush.msra.mxu0 %v306
    %v308 = vand.u32 %v26, 4294901760
    %309 = vmatpush.msra.mxu0 %v308
    %v310 = vand.u32 %v25, 4294901760
    %311 = vmatpush.msra.mxu0 %v310
    %v312 = vand.u32 %v24, 4294901760
    %313 = vmatpush.msra.mxu0 %v312
    %v314 = vand.u32 %v23, 4294901760
    %315 = vmatpush.msra.mxu0 %v314
    %v316 = vand.u32 %v22, 4294901760
    %317 = vmatpush.msra.mxu0 %v316
    %v318 = vand.u32 %v18, 4294901760
    %v319 = vsub.f32 %v18, %v318
    %v320 = vand.u32 %v319, 4294901760
    %321 = vmatmul.f32.gmra.mxu0 %v320
    %v322 = vpop.f32.mrf.mxu0
    %v323 = vadd.f32 %v284, %v322
    %324 = vdwg.mxu0
    %v325 = vand.u32 %v37, 4294901760
    %v326 = vsub.f32 %v37, %v325
    %v327 = vand.u32 %v326, 4294901760
    %328 = vmatpush.msra.mxu0 %v327
    %v329 = vand.u32 %v36, 4294901760
    %v330 = vsub.f32 %v36, %v329
    %v331 = vand.u32 %v330, 4294901760
    %332 = vmatpush.msra.mxu0 %v331
    %v333 = vand.u32 %v35, 4294901760
    %v334 = vsub.f32 %v35, %v333
    %v335 = vand.u32 %v334, 4294901760
    %336 = vmatpush.msra.mxu0 %v335
    %v337 = vand.u32 %v34, 4294901760
    %v338 = vsub.f32 %v34, %v337
    %v339 = vand.u32 %v338, 4294901760
    %340 = vmatpush.msra.mxu0 %v339
    %v341 = vand.u32 %v33, 4294901760
    %v342 = vsub.f32 %v33, %v341
    %v343 = vand.u32 %v342, 4294901760
    %344 = vmatpush.msra.mxu0 %v343
    %v345 = vand.u32 %v32, 4294901760
    %v346 = vsub.f32 %v32, %v345
    %v347 = vand.u32 %v346, 4294901760
    %348 = vmatpush.msra.mxu0 %v347
    %v349 = vand.u32 %v31, 4294901760
    %v350 = vsub.f32 %v31, %v349
    %v351 = vand.u32 %v350, 4294901760
    %352 = vmatpush.msra.mxu0 %v351
    %v353 = vand.u32 %v30, 4294901760
    %v354 = vsub.f32 %v30, %v353
    %v355 = vand.u32 %v354, 4294901760
    %356 = vmatpush.msra.mxu0 %v355
    %v357 = vand.u32 %v29, 4294901760
    %v358 = vsub.f32 %v29, %v357
    %v359 = vand.u32 %v358, 4294901760
    %360 = vmatpush.msra.mxu0 %v359
    %v361 = vand.u32 %v28, 4294901760
    %v362 = vsub.f32 %v28, %v361
    %v363 = vand.u32 %v362, 4294901760
    %364 = vmatpush.msra.mxu0 %v363
    %v365 = vand.u32 %v27, 4294901760
    %v366 = vsub.f32 %v27, %v365
    %v367 = vand.u32 %v366, 4294901760
    %368 = vmatpush.msra.mxu0 %v367
    %v369 = vand.u32 %v26, 4294901760
    %v370 = vsub.f32 %v26, %v369
    %v371 = vand.u32 %v370, 4294901760
    %372 = vmatpush.msra.mxu0 %v371
    %v373 = vand.u32 %v25, 4294901760
    %v374 = vsub.f32 %v25, %v373
    %v375 = vand.u32 %v374, 4294901760
    %376 = vmatpush.msra.mxu0 %v375
    %v377 = vand.u32 %v24, 4294901760
    %v378 = vsub.f32 %v24, %v377
    %v379 = vand.u32 %v378, 4294901760
    %380 = vmatpush.msra.mxu0 %v379
    %v381 = vand.u32 %v23, 4294901760
    %v382 = vsub.f32 %v23, %v381
    %v383 = vand.u32 %v382, 4294901760
    %384 = vmatpush.msra.mxu0 %v383
    %v385 = vand.u32 %v22, 4294901760
    %v386 = vsub.f32 %v22, %v385
    %v387 = vand.u32 %v386, 4294901760
    %388 = vmatpush.msra.mxu0 %v387
    %v389 = vand.u32 %v18, 4294901760
    %390 = vmatmul.f32.gmra.mxu0 %v389
    %v391 = vpop.f32.mrf.mxu0
    %v392 = vadd.f32 %v323, %v391
    %393 = vdwg.mxu0
    %v394 = vand.u32 %v37, 4294901760
    %395 = vmatpush.msra.mxu0 %v394
    %v396 = vand.u32 %v36, 4294901760
    %397 = vmatpush.msra.mxu0 %v396
    %v398 = vand.u32 %v35, 4294901760
    %399 = vmatpush.msra.mxu0 %v398
    %v400 = vand.u32 %v34, 4294901760
    %401 = vmatpush.msra.mxu0 %v400
    %v402 = vand.u32 %v33, 4294901760
    %403 = vmatpush.msra.mxu0 %v402
    %v404 = vand.u32 %v32, 4294901760
    %405 = vmatpush.msra.mxu0 %v404
    %v406 = vand.u32 %v31, 4294901760
    %407 = vmatpush.msra.mxu0 %v406
    %v408 = vand.u32 %v30, 4294901760
    %409 = vmatpush.msra.mxu0 %v408
    %v410 = vand.u32 %v29, 4294901760
    %411 = vmatpush.msra.mxu0 %v410
    %v412 = vand.u32 %v28, 4294901760
    %413 = vmatpush.msra.mxu0 %v412
    %v414 = vand.u32 %v27, 4294901760
    %415 = vmatpush.msra.mxu0 %v414
    %v416 = vand.u32 %v26, 4294901760
    %417 = vmatpush.msra.mxu0 %v416
    %v418 = vand.u32 %v25, 4294901760
    %419 = vmatpush.msra.mxu0 %v418
    %v420 = vand.u32 %v24, 4294901760
    %421 = vmatpush.msra.mxu0 %v420
    %v422 = vand.u32 %v23, 4294901760
    %423 = vmatpush.msra.mxu0 %v422
    %v424 = vand.u32 %v22, 4294901760
    %425 = vmatpush.msra.mxu0 %v424
    %v426 = vand.u32 %v18, 4294901760
    %427 = vmatmul.f32.gmra.mxu0 %v426
    %v428 = vpop.f32.mrf.mxu0
    %v429 = vadd.f32 %v392, %v428
    %430 = vdwg.mxu0
    %v431 = vand.u32 %v53, 4294901760
    %432 = vmatpush.msra.mxu0 %v431
    %v433 = vand.u32 %v52, 4294901760
    %434 = vmatpush.msra.mxu0 %v433
    %v435 = vand.u32 %v51, 4294901760
    %436 = vmatpush.msra.mxu0 %v435
    %v437 = vand.u32 %v50, 4294901760
    %438 = vmatpush.msra.mxu0 %v437
    %v439 = vand.u32 %v49, 4294901760
    %440 = vmatpush.msra.mxu0 %v439
    %v441 = vand.u32 %v48, 4294901760
    %442 = vmatpush.msra.mxu0 %v441
    %v443 = vand.u32 %v47, 4294901760
    %444 = vmatpush.msra.mxu0 %v443
    %v445 = vand.u32 %v46, 4294901760
    %446 = vmatpush.msra.mxu0 %v445
    %v447 = vand.u32 %v45, 4294901760
    %448 = vmatpush.msra.mxu0 %v447
    %v449 = vand.u32 %v44, 4294901760
    %450 = vmatpush.msra.mxu0 %v449
    %v451 = vand.u32 %v43, 4294901760
    %452 = vmatpush.msra.mxu0 %v451
    %v453 = vand.u32 %v42, 4294901760
    %454 = vmatpush.msra.mxu0 %v453
    %v455 = vand.u32 %v41, 4294901760
    %456 = vmatpush.msra.mxu0 %v455
    %v457 = vand.u32 %v40, 4294901760
    %458 = vmatpush.msra.mxu0 %v457
    %v459 = vand.u32 %v39, 4294901760
    %460 = vmatpush.msra.mxu0 %v459
    %v461 = vand.u32 %v38, 4294901760
    %462 = vmatpush.msra.mxu0 %v461
    %v463 = vand.u32 %v19, 4294901760
    %v464 = vsub.f32 %v19, %v463
    %v465 = vand.u32 %v464, 4294901760
    %v466 = vsub.f32 %v464, %v465
    %v467 = vand.u32 %v466, 4294901760
    %468 = vmatmul.f32.gmra.mxu0 %v467
    %v469 = vpop.f32.mrf.mxu0
    %v470 = vadd.f32 %v429, %v469
    %471 = vdwg.mxu0
    %v472 = vand.u32 %v53, 4294901760
    %v473 = vsub.f32 %v53, %v472
    %v474 = vand.u32 %v473, 4294901760
    %v475 = vsub.f32 %v473, %v474
    %v476 = vand.u32 %v475, 4294901760
    %477 = vmatpush.msra.mxu0 %v476
    %v478 = vand.u32 %v52, 4294901760
    %v479 = vsub.f32 %v52, %v478
    %v480 = vand.u32 %v479, 4294901760
    %v481 = vsub.f32 %v479, %v480
    %v482 = vand.u32 %v481, 4294901760
    %483 = vmatpush.msra.mxu0 %v482
    %v484 = vand.u32 %v51, 4294901760
    %v485 = vsub.f32 %v51, %v484
    %v486 = vand.u32 %v485, 4294901760
    %v487 = vsub.f32 %v485, %v486
    %v488 = vand.u32 %v487, 4294901760
    %489 = vmatpush.msra.mxu0 %v488
    %v490 = vand.u32 %v50, 4294901760
    %v491 = vsub.f32 %v50, %v490
    %v492 = vand.u32 %v491, 4294901760
    %v493 = vsub.f32 %v491, %v492
    %v494 = vand.u32 %v493, 4294901760
    %495 = vmatpush.msra.mxu0 %v494
    %v496 = vand.u32 %v49, 4294901760
    %v497 = vsub.f32 %v49, %v496
    %v498 = vand.u32 %v497, 4294901760
    %v499 = vsub.f32 %v497, %v498
    %v500 = vand.u32 %v499, 4294901760
    %501 = vmatpush.msra.mxu0 %v500
    %v502 = vand.u32 %v48, 4294901760
    %v503 = vsub.f32 %v48, %v502
    %v504 = vand.u32 %v503, 4294901760
    %v505 = vsub.f32 %v503, %v504
    %v506 = vand.u32 %v505, 4294901760
    %507 = vmatpush.msra.mxu0 %v506
    %v508 = vand.u32 %v47, 4294901760
    %v509 = vsub.f32 %v47, %v508
    %v510 = vand.u32 %v509, 4294901760
    %v511 = vsub.f32 %v509, %v510
    %v512 = vand.u32 %v511, 4294901760
    %513 = vmatpush.msra.mxu0 %v512
    %v514 = vand.u32 %v46, 4294901760
    %v515 = vsub.f32 %v46, %v514
    %v516 = vand.u32 %v515, 4294901760
    %v517 = vsub.f32 %v515, %v516
    %v518 = vand.u32 %v517, 4294901760
    %519 = vmatpush.msra.mxu0 %v518
    %v520 = vand.u32 %v45, 4294901760
    %v521 = vsub.f32 %v45, %v520
    %v522 = vand.u32 %v521, 4294901760
    %v523 = vsub.f32 %v521, %v522
    %v524 = vand.u32 %v523, 4294901760
    %525 = vmatpush.msra.mxu0 %v524
    %v526 = vand.u32 %v44, 4294901760
    %v527 = vsub.f32 %v44, %v526
    %v528 = vand.u32 %v527, 4294901760
    %v529 = vsub.f32 %v527, %v528
    %v530 = vand.u32 %v529, 4294901760
    %531 = vmatpush.msra.mxu0 %v530
    %v532 = vand.u32 %v43, 4294901760
    %v533 = vsub.f32 %v43, %v532
    %v534 = vand.u32 %v533, 4294901760
    %v535 = vsub.f32 %v533, %v534
    %v536 = vand.u32 %v535, 4294901760
    %537 = vmatpush.msra.mxu0 %v536
    %v538 = vand.u32 %v42, 4294901760
    %v539 = vsub.f32 %v42, %v538
    %v540 = vand.u32 %v539, 4294901760
    %v541 = vsub.f32 %v539, %v540
    %v542 = vand.u32 %v541, 4294901760
    %543 = vmatpush.msra.mxu0 %v542
    %v544 = vand.u32 %v41, 4294901760
    %v545 = vsub.f32 %v41, %v544
    %v546 = vand.u32 %v545, 4294901760
    %v547 = vsub.f32 %v545, %v546
    %v548 = vand.u32 %v547, 4294901760
    %549 = vmatpush.msra.mxu0 %v548
    %v550 = vand.u32 %v40, 4294901760
    %v551 = vsub.f32 %v40, %v550
    %v552 = vand.u32 %v551, 4294901760
    %v553 = vsub.f32 %v551, %v552
    %v554 = vand.u32 %v553, 4294901760
    %555 = vmatpush.msra.mxu0 %v554
    %v556 = vand.u32 %v39, 4294901760
    %v557 = vsub.f32 %v39, %v556
    %v558 = vand.u32 %v557, 4294901760
    %v559 = vsub.f32 %v557, %v558
    %v560 = vand.u32 %v559, 4294901760
    %561 = vmatpush.msra.mxu0 %v560
    %v562 = vand.u32 %v38, 4294901760
    %v563 = vsub.f32 %v38, %v562
    %v564 = vand.u32 %v563, 4294901760
    %v565 = vsub.f32 %v563, %v564
    %v566 = vand.u32 %v565, 4294901760
    %567 = vmatpush.msra.mxu0 %v566
    %v568 = vand.u32 %v19, 4294901760
    %569 = vmatmul.f32.gmra.mxu0 %v568
    %v570 = vpop.f32.mrf.mxu0
    %v571 = vadd.f32 %v470, %v570
    %572 = vdwg.mxu0
    %v573 = vand.u32 %v53, 4294901760
    %v574 = vsub.f32 %v53, %v573
    %575 = vmatpush.msra.mxu0 %v574
    %v576 = vand.u32 %v52, 4294901760
    %v577 = vsub.f32 %v52, %v576
    %578 = vmatpush.msra.mxu0 %v577
    %v579 = vand.u32 %v51, 4294901760
    %v580 = vsub.f32 %v51, %v579
    %581 = vmatpush.msra.mxu0 %v580
    %v582 = vand.u32 %v50, 4294901760
    %v583 = vsub.f32 %v50, %v582
    %584 = vmatpush.msra.mxu0 %v583
    %v585 = vand.u32 %v49, 4294901760
    %v586 = vsub.f32 %v49, %v585
    %587 = vmatpush.msra.mxu0 %v586
    %v588 = vand.u32 %v48, 4294901760
    %v589 = vsub.f32 %v48, %v588
    %590 = vmatpush.msra.mxu0 %v589
    %v591 = vand.u32 %v47, 4294901760
    %v592 = vsub.f32 %v47, %v591
    %593 = vmatpush.msra.mxu0 %v592
    %v594 = vand.u32 %v46, 4294901760
    %v595 = vsub.f32 %v46, %v594
    %596 = vmatpush.msra.mxu0 %v595
    %v597 = vand.u32 %v45, 4294901760
    %v598 = vsub.f32 %v45, %v597
    %599 = vmatpush.msra.mxu0 %v598
    %v600 = vand.u32 %v44, 4294901760
    %v601 = vsub.f32 %v44, %v600
    %602 = vmatpush.msra.mxu0 %v601
    %v603 = vand.u32 %v43, 4294901760
    %v604 = vsub.f32 %v43, %v603
    %605 = vmatpush.msra.mxu0 %v604
    %v606 = vand.u32 %v42, 4294901760
    %v607 = vsub.f32 %v42, %v606
    %608 = vmatpush.msra.mxu0 %v607
    %v609 = vand.u32 %v41, 4294901760
    %v610 = vsub.f32 %v41, %v609
    %611 = vmatpush.msra.mxu0 %v610
    %v612 = vand.u32 %v40, 4294901760
    %v613 = vsub.f32 %v40, %v612
    %614 = vmatpush.msra.mxu0 %v613
    %v615 = vand.u32 %v39, 4294901760
    %v616 = vsub.f32 %v39, %v615
    %617 = vmatpush.msra.mxu0 %v616
    %v618 = vand.u32 %v38, 4294901760
    %v619 = vsub.f32 %v38, %v618
    %620 = vmatpush.msra.mxu0 %v619
    %v621 = vand.u32 %v19, 4294901760
    %v622 = vsub.f32 %v19, %v621
    %623 = vmatmul.f32.gmra.mxu0 %v622
    %v624 = vpop.f32.mrf.mxu0
    %v625 = vadd.f32 %v571, %v624
    %626 = vdwg.mxu0
    %v627 = vand.u32 %v53, 4294901760
    %628 = vmatpush.msra.mxu0 %v627
    %v629 = vand.u32 %v52, 4294901760
    %630 = vmatpush.msra.mxu0 %v629
    %v631 = vand.u32 %v51, 4294901760
    %632 = vmatpush.msra.mxu0 %v631
    %v633 = vand.u32 %v50, 4294901760
    %634 = vmatpush.msra.mxu0 %v633
    %v635 = vand.u32 %v49, 4294901760
    %636 = vmatpush.msra.mxu0 %v635
    %v637 = vand.u32 %v48, 4294901760
    %638 = vmatpush.msra.mxu0 %v637
    %v639 = vand.u32 %v47, 4294901760
    %640 = vmatpush.msra.mxu0 %v639
    %v641 = vand.u32 %v46, 4294901760
    %642 = vmatpush.msra.mxu0 %v641
    %v643 = vand.u32 %v45, 4294901760
    %644 = vmatpush.msra.mxu0 %v643
    %v645 = vand.u32 %v44, 4294901760
    %646 = vmatpush.msra.mxu0 %v645
    %v647 = vand.u32 %v43, 4294901760
    %648 = vmatpush.msra.mxu0 %v647
    %v649 = vand.u32 %v42, 4294901760
    %650 = vmatpush.msra.mxu0 %v649
    %v651 = vand.u32 %v41, 4294901760
    %652 = vmatpush.msra.mxu0 %v651
    %v653 = vand.u32 %v40, 4294901760
    %654 = vmatpush.msra.mxu0 %v653
    %v655 = vand.u32 %v39, 4294901760
    %656 = vmatpush.msra.mxu0 %v655
    %v657 = vand.u32 %v38, 4294901760
    %658 = vmatpush.msra.mxu0 %v657
    %v659 = vand.u32 %v19, 4294901760
    %v660 = vsub.f32 %v19, %v659
    %v661 = vand.u32 %v660, 4294901760
    %662 = vmatmul.f32.gmra.mxu0 %v661
    %v663 = vpop.f32.mrf.mxu0
    %v664 = vadd.f32 %v625, %v663
    %665 = vdwg.mxu0
    %v666 = vand.u32 %v53, 4294901760
    %v667 = vsub.f32 %v53, %v666
    %v668 = vand.u32 %v667, 4294901760
    %669 = vmatpush.msra.mxu0 %v668
    %v670 = vand.u32 %v52, 4294901760
    %v671 = vsub.f32 %v52, %v670
    %v672 = vand.u32 %v671, 4294901760
    %673 = vmatpush.msra.mxu0 %v672
    %v674 = vand.u32 %v51, 4294901760
    %v675 = vsub.f32 %v51, %v674
    %v676 = vand.u32 %v675, 4294901760
    %677 = vmatpush.msra.mxu0 %v676
    %v678 = vand.u32 %v50, 4294901760
    %v679 = vsub.f32 %v50, %v678
    %v680 = vand.u32 %v679, 4294901760
    %681 = vmatpush.msra.mxu0 %v680
    %v682 = vand.u32 %v49, 4294901760
    %v683 = vsub.f32 %v49, %v682
    %v684 = vand.u32 %v683, 4294901760
    %685 = vmatpush.msra.mxu0 %v684
    %v686 = vand.u32 %v48, 4294901760
    %v687 = vsub.f32 %v48, %v686
    %v688 = vand.u32 %v687, 4294901760
    %689 = vmatpush.msra.mxu0 %v688
    %v690 = vand.u32 %v47, 4294901760
    %v691 = vsub.f32 %v47, %v690
    %v692 = vand.u32 %v691, 4294901760
    %693 = vmatpush.msra.mxu0 %v692
    %v694 = vand.u32 %v46, 4294901760
    %v695 = vsub.f32 %v46, %v694
    %v696 = vand.u32 %v695, 4294901760
    %697 = vmatpush.msra.mxu0 %v696
    %v698 = vand.u32 %v45, 4294901760
    %v699 = vsub.f32 %v45, %v698
    %v700 = vand.u32 %v699, 4294901760
    %701 = vmatpush.msra.mxu0 %v700
    %v702 = vand.u32 %v44, 4294901760
    %v703 = vsub.f32 %v44, %v702
    %v704 = vand.u32 %v703, 4294901760
    %705 = vmatpush.msra.mxu0 %v704
    %v706 = vand.u32 %v43, 4294901760
    %v707 = vsub.f32 %v43, %v706
    %v708 = vand.u32 %v707, 4294901760
    %709 = vmatpush.msra.mxu0 %v708
    %v710 = vand.u32 %v42, 4294901760
    %v711 = vsub.f32 %v42, %v710
    %v712 = vand.u32 %v711, 4294901760
    %713 = vmatpush.msra.mxu0 %v712
    %v714 = vand.u32 %v41, 4294901760
    %v715 = vsub.f32 %v41, %v714
    %v716 = vand.u32 %v715, 4294901760
    %717 = vmatpush.msra.mxu0 %v716
    %v718 = vand.u32 %v40, 4294901760
    %v719 = vsub.f32 %v40, %v718
    %v720 = vand.u32 %v719, 4294901760
    %721 = vmatpush.msra.mxu0 %v720
    %v722 = vand.u32 %v39, 4294901760
    %v723 = vsub.f32 %v39, %v722
    %v724 = vand.u32 %v723, 4294901760
    %725 = vmatpush.msra.mxu0 %v724
    %v726 = vand.u32 %v38, 4294901760
    %v727 = vsub.f32 %v38, %v726
    %v728 = vand.u32 %v727, 4294901760
    %729 = vmatpush.msra.mxu0 %v728
    %v730 = vand.u32 %v19, 4294901760
    %731 = vmatmul.f32.gmra.mxu0 %v730
    %v732 = vpop.f32.mrf.mxu0
    %v733 = vadd.f32 %v664, %v732
    %734 = vdwg.mxu0
    %v735 = vand.u32 %v53, 4294901760
    %736 = vmatpush.msra.mxu0 %v735
    %v737 = vand.u32 %v52, 4294901760
    %738 = vmatpush.msra.mxu0 %v737
    %v739 = vand.u32 %v51, 4294901760
    %740 = vmatpush.msra.mxu0 %v739
    %v741 = vand.u32 %v50, 4294901760
    %742 = vmatpush.msra.mxu0 %v741
    %v743 = vand.u32 %v49, 4294901760
    %744 = vmatpush.msra.mxu0 %v743
    %v745 = vand.u32 %v48, 4294901760
    %746 = vmatpush.msra.mxu0 %v745
    %v747 = vand.u32 %v47, 4294901760
    %748 = vmatpush.msra.mxu0 %v747
    %v749 = vand.u32 %v46, 4294901760
    %750 = vmatpush.msra.mxu0 %v749
    %v751 = vand.u32 %v45, 4294901760
    %752 = vmatpush.msra.mxu0 %v751
    %v753 = vand.u32 %v44, 4294901760
    %754 = vmatpush.msra.mxu0 %v753
    %v755 = vand.u32 %v43, 4294901760
    %756 = vmatpush.msra.mxu0 %v755
    %v757 = vand.u32 %v42, 4294901760
    %758 = vmatpush.msra.mxu0 %v757
    %v759 = vand.u32 %v41, 4294901760
    %760 = vmatpush.msra.mxu0 %v759
    %v761 = vand.u32 %v40, 4294901760
    %762 = vmatpush.msra.mxu0 %v761
    %v763 = vand.u32 %v39, 4294901760
    %764 = vmatpush.msra.mxu0 %v763
    %v765 = vand.u32 %v38, 4294901760
    %766 = vmatpush.msra.mxu0 %v765
    %v767 = vand.u32 %v19, 4294901760
    %768 = vmatmul.f32.gmra.mxu0 %v767
    %v769 = vpop.f32.mrf.mxu0
    %v770 = vadd.f32 %v733, %v769
    %771 = vdwg.mxu0
    %v772 = vand.u32 %v69, 4294901760
    %773 = vmatpush.msra.mxu0 %v772
    %v774 = vand.u32 %v68, 4294901760
    %775 = vmatpush.msra.mxu0 %v774
    %v776 = vand.u32 %v67, 4294901760
    %777 = vmatpush.msra.mxu0 %v776
    %v778 = vand.u32 %v66, 4294901760
    %779 = vmatpush.msra.mxu0 %v778
    %v780 = vand.u32 %v65, 4294901760
    %781 = vmatpush.msra.mxu0 %v780
    %v782 = vand.u32 %v64, 4294901760
    %783 = vmatpush.msra.mxu0 %v782
    %v784 = vand.u32 %v63, 4294901760
    %785 = vmatpush.msra.mxu0 %v784
    %v786 = vand.u32 %v62, 4294901760
    %787 = vmatpush.msra.mxu0 %v786
    %v788 = vand.u32 %v61, 4294901760
    %789 = vmatpush.msra.mxu0 %v788
    %v790 = vand.u32 %v60, 4294901760
    %791 = vmatpush.msra.mxu0 %v790
    %v792 = vand.u32 %v59, 4294901760
    %793 = vmatpush.msra.mxu0 %v792
    %v794 = vand.u32 %v58, 4294901760
    %795 = vmatpush.msra.mxu0 %v794
    %v796 = vand.u32 %v57, 4294901760
    %797 = vmatpush.msra.mxu0 %v796
    %v798 = vand.u32 %v56, 4294901760
    %799 = vmatpush.msra.mxu0 %v798
    %v800 = vand.u32 %v55, 4294901760
    %801 = vmatpush.msra.mxu0 %v800
    %v802 = vand.u32 %v54, 4294901760
    %803 = vmatpush.msra.mxu0 %v802
    %v804 = vand.u32 %v20, 4294901760
    %v805 = vsub.f32 %v20, %v804
    %v806 = vand.u32 %v805, 4294901760
    %v807 = vsub.f32 %v805, %v806
    %v808 = vand.u32 %v807, 4294901760
    %809 = vmatmul.f32.gmra.mxu0 %v808
    %v810 = vpop.f32.mrf.mxu0
    %v811 = vadd.f32 %v770, %v810
    %812 = vdwg.mxu0
    %v813 = vand.u32 %v69, 4294901760
    %v814 = vsub.f32 %v69, %v813
    %v815 = vand.u32 %v814, 4294901760
    %v816 = vsub.f32 %v814, %v815
    %v817 = vand.u32 %v816, 4294901760
    %818 = vmatpush.msra.mxu0 %v817
    %v819 = vand.u32 %v68, 4294901760
    %v820 = vsub.f32 %v68, %v819
    %v821 = vand.u32 %v820, 4294901760
    %v822 = vsub.f32 %v820, %v821
    %v823 = vand.u32 %v822, 4294901760
    %824 = vmatpush.msra.mxu0 %v823
    %v825 = vand.u32 %v67, 4294901760
    %v826 = vsub.f32 %v67, %v825
    %v827 = vand.u32 %v826, 4294901760
    %v828 = vsub.f32 %v826, %v827
    %v829 = vand.u32 %v828, 4294901760
    %830 = vmatpush.msra.mxu0 %v829
    %v831 = vand.u32 %v66, 4294901760
    %v832 = vsub.f32 %v66, %v831
    %v833 = vand.u32 %v832, 4294901760
    %v834 = vsub.f32 %v832, %v833
    %v835 = vand.u32 %v834, 4294901760
    %836 = vmatpush.msra.mxu0 %v835
    %v837 = vand.u32 %v65, 4294901760
    %v838 = vsub.f32 %v65, %v837
    %v839 = vand.u32 %v838, 4294901760
    %v840 = vsub.f32 %v838, %v839
    %v841 = vand.u32 %v840, 4294901760
    %842 = vmatpush.msra.mxu0 %v841
    %v843 = vand.u32 %v64, 4294901760
    %v844 = vsub.f32 %v64, %v843
    %v845 = vand.u32 %v844, 4294901760
    %v846 = vsub.f32 %v844, %v845
    %v847 = vand.u32 %v846, 4294901760
    %848 = vmatpush.msra.mxu0 %v847
    %v849 = vand.u32 %v63, 4294901760
    %v850 = vsub.f32 %v63, %v849
    %v851 = vand.u32 %v850, 4294901760
    %v852 = vsub.f32 %v850, %v851
    %v853 = vand.u32 %v852, 4294901760
    %854 = vmatpush.msra.mxu0 %v853
    %v855 = vand.u32 %v62, 4294901760
    %v856 = vsub.f32 %v62, %v855
    %v857 = vand.u32 %v856, 4294901760
    %v858 = vsub.f32 %v856, %v857
    %v859 = vand.u32 %v858, 4294901760
    %860 = vmatpush.msra.mxu0 %v859
    %v861 = vand.u32 %v61, 4294901760
    %v862 = vsub.f32 %v61, %v861
    %v863 = vand.u32 %v862, 4294901760
    %v864 = vsub.f32 %v862, %v863
    %v865 = vand.u32 %v864, 4294901760
    %866 = vmatpush.msra.mxu0 %v865
    %v867 = vand.u32 %v60, 4294901760
    %v868 = vsub.f32 %v60, %v867
    %v869 = vand.u32 %v868, 4294901760
    %v870 = vsub.f32 %v868, %v869
    %v871 = vand.u32 %v870, 4294901760
    %872 = vmatpush.msra.mxu0 %v871
    %v873 = vand.u32 %v59, 4294901760
    %v874 = vsub.f32 %v59, %v873
    %v875 = vand.u32 %v874, 4294901760
    %v876 = vsub.f32 %v874, %v875
    %v877 = vand.u32 %v876, 4294901760
    %878 = vmatpush.msra.mxu0 %v877
    %v879 = vand.u32 %v58, 4294901760
    %v880 = vsub.f32 %v58, %v879
    %v881 = vand.u32 %v880, 4294901760
    %v882 = vsub.f32 %v880, %v881
    %v883 = vand.u32 %v882, 4294901760
    %884 = vmatpush.msra.mxu0 %v883
    %v885 = vand.u32 %v57, 4294901760
    %v886 = vsub.f32 %v57, %v885
    %v887 = vand.u32 %v886, 4294901760
    %v888 = vsub.f32 %v886, %v887
    %v889 = vand.u32 %v888, 4294901760
    %890 = vmatpush.msra.mxu0 %v889
    %v891 = vand.u32 %v56, 4294901760
    %v892 = vsub.f32 %v56, %v891
    %v893 = vand.u32 %v892, 4294901760
    %v894 = vsub.f32 %v892, %v893
    %v895 = vand.u32 %v894, 4294901760
    %896 = vmatpush.msra.mxu0 %v895
    %v897 = vand.u32 %v55, 4294901760
    %v898 = vsub.f32 %v55, %v897
    %v899 = vand.u32 %v898, 4294901760
    %v900 = vsub.f32 %v898, %v899
    %v901 = vand.u32 %v900, 4294901760
    %902 = vmatpush.msra.mxu0 %v901
    %v903 = vand.u32 %v54, 4294901760
    %v904 = vsub.f32 %v54, %v903
    %v905 = vand.u32 %v904, 4294901760
    %v906 = vsub.f32 %v904, %v905
    %v907 = vand.u32 %v906, 4294901760
    %908 = vmatpush.msra.mxu0 %v907
    %v909 = vand.u32 %v20, 4294901760
    %910 = vmatmul.f32.gmra.mxu0 %v909
    %v911 = vpop.f32.mrf.mxu0
    %v912 = vadd.f32 %v811, %v911
    %913 = vdwg.mxu0
    %v914 = vand.u32 %v69, 4294901760
    %v915 = vsub.f32 %v69, %v914
    %916 = vmatpush.msra.mxu0 %v915
    %v917 = vand.u32 %v68, 4294901760
    %v918 = vsub.f32 %v68, %v917
    %919 = vmatpush.msra.mxu0 %v918
    %v920 = vand.u32 %v67, 4294901760
    %v921 = vsub.f32 %v67, %v920
    %922 = vmatpush.msra.mxu0 %v921
    %v923 = vand.u32 %v66, 4294901760
    %v924 = vsub.f32 %v66, %v923
    %925 = vmatpush.msra.mxu0 %v924
    %v926 = vand.u32 %v65, 4294901760
    %v927 = vsub.f32 %v65, %v926
    %928 = vmatpush.msra.mxu0 %v927
    %v929 = vand.u32 %v64, 4294901760
    %v930 = vsub.f32 %v64, %v929
    %931 = vmatpush.msra.mxu0 %v930
    %v932 = vand.u32 %v63, 4294901760
    %v933 = vsub.f32 %v63, %v932
    %934 = vmatpush.msra.mxu0 %v933
    %v935 = vand.u32 %v62, 4294901760
    %v936 = vsub.f32 %v62, %v935
    %937 = vmatpush.msra.mxu0 %v936
    %v938 = vand.u32 %v61, 4294901760
    %v939 = vsub.f32 %v61, %v938
    %940 = vmatpush.msra.mxu0 %v939
    %v941 = vand.u32 %v60, 4294901760
    %v942 = vsub.f32 %v60, %v941
    %943 = vmatpush.msra.mxu0 %v942
    %v944 = vand.u32 %v59, 4294901760
    %v945 = vsub.f32 %v59, %v944
    %946 = vmatpush.msra.mxu0 %v945
    %v947 = vand.u32 %v58, 4294901760
    %v948 = vsub.f32 %v58, %v947
    %949 = vmatpush.msra.mxu0 %v948
    %v950 = vand.u32 %v57, 4294901760
    %v951 = vsub.f32 %v57, %v950
    %952 = vmatpush.msra.mxu0 %v951
    %v953 = vand.u32 %v56, 4294901760
    %v954 = vsub.f32 %v56, %v953
    %955 = vmatpush.msra.mxu0 %v954
    %v956 = vand.u32 %v55, 4294901760
    %v957 = vsub.f32 %v55, %v956
    %958 = vmatpush.msra.mxu0 %v957
    %v959 = vand.u32 %v54, 4294901760
    %v960 = vsub.f32 %v54, %v959
    %961 = vmatpush.msra.mxu0 %v960
    %v962 = vand.u32 %v20, 4294901760
    %v963 = vsub.f32 %v20, %v962
    %964 = vmatmul.f32.gmra.mxu0 %v963
    %v965 = vpop.f32.mrf.mxu0
    %v966 = vadd.f32 %v912, %v965
    %967 = vdwg.mxu0
    %v968 = vand.u32 %v69, 4294901760
    %969 = vmatpush.msra.mxu0 %v968
    %v970 = vand.u32 %v68, 4294901760
    %971 = vmatpush.msra.mxu0 %v970
    %v972 = vand.u32 %v67, 4294901760
    %973 = vmatpush.msra.mxu0 %v972
    %v974 = vand.u32 %v66, 4294901760
    %975 = vmatpush.msra.mxu0 %v974
    %v976 = vand.u32 %v65, 4294901760
    %977 = vmatpush.msra.mxu0 %v976
    %v978 = vand.u32 %v64, 4294901760
    %979 = vmatpush.msra.mxu0 %v978
    %v980 = vand.u32 %v63, 4294901760
    %981 = vmatpush.msra.mxu0 %v980
    %v982 = vand.u32 %v62, 4294901760
    %983 = vmatpush.msra.mxu0 %v982
    %v984 = vand.u32 %v61, 4294901760
    %985 = vmatpush.msra.mxu0 %v984
    %v986 = vand.u32 %v60, 4294901760
    %987 = vmatpush.msra.mxu0 %v986
    %v988 = vand.u32 %v59, 4294901760
    %989 = vmatpush.msra.mxu0 %v988
    %v990 = vand.u32 %v58, 4294901760
    %991 = vmatpush.msra.mxu0 %v990
    %v992 = vand.u32 %v57, 4294901760
    %993 = vmatpush.msra.mxu0 %v992
    %v994 = vand.u32 %v56, 4294901760
    %995 = vmatpush.msra.mxu0 %v994
    %v996 = vand.u32 %v55, 4294901760
    %997 = vmatpush.msra.mxu0 %v996
    %v998 = vand.u32 %v54, 4294901760
    %999 = vmatpush.msra.mxu0 %v998
    %v1000 = vand.u32 %v20, 4294901760
    %v1001 = vsub.f32 %v20, %v1000
    %v1002 = vand.u32 %v1001, 4294901760
    %1003 = vmatmul.f32.gmra.mxu0 %v1002
    %v1004 = vpop.f32.mrf.mxu0
    %v1005 = vadd.f32 %v966, %v1004
    %1006 = vdwg.mxu0
    %v1007 = vand.u32 %v69, 4294901760
    %v1008 = vsub.f32 %v69, %v1007
    %v1009 = vand.u32 %v1008, 4294901760
    %1010 = vmatpush.msra.mxu0 %v1009
    %v1011 = vand.u32 %v68, 4294901760
    %v1012 = vsub.f32 %v68, %v1011
    %v1013 = vand.u32 %v1012, 4294901760
    %1014 = vmatpush.msra.mxu0 %v1013
    %v1015 = vand.u32 %v67, 4294901760
    %v1016 = vsub.f32 %v67, %v1015
    %v1017 = vand.u32 %v1016, 4294901760
    %1018 = vmatpush.msra.mxu0 %v1017
    %v1019 = vand.u32 %v66, 4294901760
    %v1020 = vsub.f32 %v66, %v1019
    %v1021 = vand.u32 %v1020, 4294901760
    %1022 = vmatpush.msra.mxu0 %v1021
    %v1023 = vand.u32 %v65, 4294901760
    %v1024 = vsub.f32 %v65, %v1023
    %v1025 = vand.u32 %v1024, 4294901760
    %1026 = vmatpush.msra.mxu0 %v1025
    %v1027 = vand.u32 %v64, 4294901760
    %v1028 = vsub.f32 %v64, %v1027
    %v1029 = vand.u32 %v1028, 4294901760
    %1030 = vmatpush.msra.mxu0 %v1029
    %v1031 = vand.u32 %v63, 4294901760
    %v1032 = vsub.f32 %v63, %v1031
    %v1033 = vand.u32 %v1032, 4294901760
    %1034 = vmatpush.msra.mxu0 %v1033
    %v1035 = vand.u32 %v62, 4294901760
    %v1036 = vsub.f32 %v62, %v1035
    %v1037 = vand.u32 %v1036, 4294901760
    %1038 = vmatpush.msra.mxu0 %v1037
    %v1039 = vand.u32 %v61, 4294901760
    %v1040 = vsub.f32 %v61, %v1039
    %v1041 = vand.u32 %v1040, 4294901760
    %1042 = vmatpush.msra.mxu0 %v1041
    %v1043 = vand.u32 %v60, 4294901760
    %v1044 = vsub.f32 %v60, %v1043
    %v1045 = vand.u32 %v1044, 4294901760
    %1046 = vmatpush.msra.mxu0 %v1045
    %v1047 = vand.u32 %v59, 4294901760
    %v1048 = vsub.f32 %v59, %v1047
    %v1049 = vand.u32 %v1048, 4294901760
    %1050 = vmatpush.msra.mxu0 %v1049
    %v1051 = vand.u32 %v58, 4294901760
    %v1052 = vsub.f32 %v58, %v1051
    %v1053 = vand.u32 %v1052, 4294901760
    %1054 = vmatpush.msra.mxu0 %v1053
    %v1055 = vand.u32 %v57, 4294901760
    %v1056 = vsub.f32 %v57, %v1055
    %v1057 = vand.u32 %v1056, 4294901760
    %1058 = vmatpush.msra.mxu0 %v1057
    %v1059 = vand.u32 %v56, 4294901760
    %v1060 = vsub.f32 %v56, %v1059
    %v1061 = vand.u32 %v1060, 4294901760
    %1062 = vmatpush.msra.mxu0 %v1061
    %v1063 = vand.u32 %v55, 4294901760
    %v1064 = vsub.f32 %v55, %v1063
    %v1065 = vand.u32 %v1064, 4294901760
    %1066 = vmatpush.msra.mxu0 %v1065
    %v1067 = vand.u32 %v54, 4294901760
    %v1068 = vsub.f32 %v54, %v1067
    %v1069 = vand.u32 %v1068, 4294901760
    %1070 = vmatpush.msra.mxu0 %v1069
    %v1071 = vand.u32 %v20, 4294901760
    %1072 = vmatmul.f32.gmra.mxu0 %v1071
    %v1073 = vpop.f32.mrf.mxu0
    %v1074 = vadd.f32 %v1005, %v1073
    %1075 = vdwg.mxu0
    %v1076 = vand.u32 %v69, 4294901760
    %1077 = vmatpush.msra.mxu0 %v1076
    %v1078 = vand.u32 %v68, 4294901760
    %1079 = vmatpush.msra.mxu0 %v1078
    %v1080 = vand.u32 %v67, 4294901760
    %1081 = vmatpush.msra.mxu0 %v1080
    %v1082 = vand.u32 %v66, 4294901760
    %1083 = vmatpush.msra.mxu0 %v1082
    %v1084 = vand.u32 %v65, 4294901760
    %1085 = vmatpush.msra.mxu0 %v1084
    %v1086 = vand.u32 %v64, 4294901760
    %1087 = vmatpush.msra.mxu0 %v1086
    %v1088 = vand.u32 %v63, 4294901760
    %1089 = vmatpush.msra.mxu0 %v1088
    %v1090 = vand.u32 %v62, 4294901760
    %1091 = vmatpush.msra.mxu0 %v1090
    %v1092 = vand.u32 %v61, 4294901760
    %1093 = vmatpush.msra.mxu0 %v1092
    %v1094 = vand.u32 %v60, 4294901760
    %1095 = vmatpush.msra.mxu0 %v1094
    %v1096 = vand.u32 %v59, 4294901760
    %1097 = vmatpush.msra.mxu0 %v1096
    %v1098 = vand.u32 %v58, 4294901760
    %1099 = vmatpush.msra.mxu0 %v1098
    %v1100 = vand.u32 %v57, 4294901760
    %1101 = vmatpush.msra.mxu0 %v1100
    %v1102 = vand.u32 %v56, 4294901760
    %1103 = vmatpush.msra.mxu0 %v1102
    %v1104 = vand.u32 %v55, 4294901760
    %1105 = vmatpush.msra.mxu0 %v1104
    %v1106 = vand.u32 %v54, 4294901760
    %1107 = vmatpush.msra.mxu0 %v1106
    %v1108 = vand.u32 %v20, 4294901760
    %1109 = vmatmul.f32.gmra.mxu0 %v1108
    %v1110 = vpop.f32.mrf.mxu0
    %v1111 = vadd.f32 %v1074, %v1110
    %1112 = vdwg.mxu0
    %v1113 = vand.u32 %v85, 4294901760
    %1114 = vmatpush.msra.mxu0 %v1113
    %v1115 = vand.u32 %v84, 4294901760
    %1116 = vmatpush.msra.mxu0 %v1115
    %v1117 = vand.u32 %v83, 4294901760
    %1118 = vmatpush.msra.mxu0 %v1117
    %v1119 = vand.u32 %v82, 4294901760
    %1120 = vmatpush.msra.mxu0 %v1119
    %v1121 = vand.u32 %v81, 4294901760
    %1122 = vmatpush.msra.mxu0 %v1121
    %v1123 = vand.u32 %v80, 4294901760
    %1124 = vmatpush.msra.mxu0 %v1123
    %v1125 = vand.u32 %v79, 4294901760
    %1126 = vmatpush.msra.mxu0 %v1125
    %v1127 = vand.u32 %v78, 4294901760
    %1128 = vmatpush.msra.mxu0 %v1127
    %v1129 = vand.u32 %v77, 4294901760
    %1130 = vmatpush.msra.mxu0 %v1129
    %v1131 = vand.u32 %v76, 4294901760
    %1132 = vmatpush.msra.mxu0 %v1131
    %v1133 = vand.u32 %v75, 4294901760
    %1134 = vmatpush.msra.mxu0 %v1133
    %v1135 = vand.u32 %v74, 4294901760
    %1136 = vmatpush.msra.mxu0 %v1135
    %v1137 = vand.u32 %v73, 4294901760
    %1138 = vmatpush.msra.mxu0 %v1137
    %v1139 = vand.u32 %v72, 4294901760
    %1140 = vmatpush.msra.mxu0 %v1139
    %v1141 = vand.u32 %v71, 4294901760
    %1142 = vmatpush.msra.mxu0 %v1141
    %v1143 = vand.u32 %v70, 4294901760
    %1144 = vmatpush.msra.mxu0 %v1143
    %v1145 = vand.u32 %v21, 4294901760
    %v1146 = vsub.f32 %v21, %v1145
    %v1147 = vand.u32 %v1146, 4294901760
    %v1148 = vsub.f32 %v1146, %v1147
    %v1149 = vand.u32 %v1148, 4294901760
    %1150 = vmatmul.f32.gmra.mxu0 %v1149
    %v1151 = vpop.f32.mrf.mxu0
    %v1152 = vadd.f32 %v1111, %v1151
    %1153 = vdwg.mxu0
    %v1154 = vand.u32 %v85, 4294901760
    %v1155 = vsub.f32 %v85, %v1154
    %v1156 = vand.u32 %v1155, 4294901760
    %v1157 = vsub.f32 %v1155, %v1156
    %v1158 = vand.u32 %v1157, 4294901760
    %1159 = vmatpush.msra.mxu0 %v1158
    %v1160 = vand.u32 %v84, 4294901760
    %v1161 = vsub.f32 %v84, %v1160
    %v1162 = vand.u32 %v1161, 4294901760
    %v1163 = vsub.f32 %v1161, %v1162
    %v1164 = vand.u32 %v1163, 4294901760
    %1165 = vmatpush.msra.mxu0 %v1164
    %v1166 = vand.u32 %v83, 4294901760
    %v1167 = vsub.f32 %v83, %v1166
    %v1168 = vand.u32 %v1167, 4294901760
    %v1169 = vsub.f32 %v1167, %v1168
    %v1170 = vand.u32 %v1169, 4294901760
    %1171 = vmatpush.msra.mxu0 %v1170
    %v1172 = vand.u32 %v82, 4294901760
    %v1173 = vsub.f32 %v82, %v1172
    %v1174 = vand.u32 %v1173, 4294901760
    %v1175 = vsub.f32 %v1173, %v1174
    %v1176 = vand.u32 %v1175, 4294901760
    %1177 = vmatpush.msra.mxu0 %v1176
    %v1178 = vand.u32 %v81, 4294901760
    %v1179 = vsub.f32 %v81, %v1178
    %v1180 = vand.u32 %v1179, 4294901760
    %v1181 = vsub.f32 %v1179, %v1180
    %v1182 = vand.u32 %v1181, 4294901760
    %1183 = vmatpush.msra.mxu0 %v1182
    %v1184 = vand.u32 %v80, 4294901760
    %v1185 = vsub.f32 %v80, %v1184
    %v1186 = vand.u32 %v1185, 4294901760
    %v1187 = vsub.f32 %v1185, %v1186
    %v1188 = vand.u32 %v1187, 4294901760
    %1189 = vmatpush.msra.mxu0 %v1188
    %v1190 = vand.u32 %v79, 4294901760
    %v1191 = vsub.f32 %v79, %v1190
    %v1192 = vand.u32 %v1191, 4294901760
    %v1193 = vsub.f32 %v1191, %v1192
    %v1194 = vand.u32 %v1193, 4294901760
    %1195 = vmatpush.msra.mxu0 %v1194
    %v1196 = vand.u32 %v78, 4294901760
    %v1197 = vsub.f32 %v78, %v1196
    %v1198 = vand.u32 %v1197, 4294901760
    %v1199 = vsub.f32 %v1197, %v1198
    %v1200 = vand.u32 %v1199, 4294901760
    %1201 = vmatpush.msra.mxu0 %v1200
    %v1202 = vand.u32 %v77, 4294901760
    %v1203 = vsub.f32 %v77, %v1202
    %v1204 = vand.u32 %v1203, 4294901760
    %v1205 = vsub.f32 %v1203, %v1204
    %v1206 = vand.u32 %v1205, 4294901760
    %1207 = vmatpush.msra.mxu0 %v1206
    %v1208 = vand.u32 %v76, 4294901760
    %v1209 = vsub.f32 %v76, %v1208
    %v1210 = vand.u32 %v1209, 4294901760
    %v1211 = vsub.f32 %v1209, %v1210
    %v1212 = vand.u32 %v1211, 4294901760
    %1213 = vmatpush.msra.mxu0 %v1212
    %v1214 = vand.u32 %v75, 4294901760
    %v1215 = vsub.f32 %v75, %v1214
    %v1216 = vand.u32 %v1215, 4294901760
    %v1217 = vsub.f32 %v1215, %v1216
    %v1218 = vand.u32 %v1217, 4294901760
    %1219 = vmatpush.msra.mxu0 %v1218
    %v1220 = vand.u32 %v74, 4294901760
    %v1221 = vsub.f32 %v74, %v1220
    %v1222 = vand.u32 %v1221, 4294901760
    %v1223 = vsub.f32 %v1221, %v1222
    %v1224 = vand.u32 %v1223, 4294901760
    %1225 = vmatpush.msra.mxu0 %v1224
    %v1226 = vand.u32 %v73, 4294901760
    %v1227 = vsub.f32 %v73, %v1226
    %v1228 = vand.u32 %v1227, 4294901760
    %v1229 = vsub.f32 %v1227, %v1228
    %v1230 = vand.u32 %v1229, 4294901760
    %1231 = vmatpush.msra.mxu0 %v1230
    %v1232 = vand.u32 %v72, 4294901760
    %v1233 = vsub.f32 %v72, %v1232
    %v1234 = vand.u32 %v1233, 4294901760
    %v1235 = vsub.f32 %v1233, %v1234
    %v1236 = vand.u32 %v1235, 4294901760
    %1237 = vmatpush.msra.mxu0 %v1236
    %v1238 = vand.u32 %v71, 4294901760
    %v1239 = vsub.f32 %v71, %v1238
    %v1240 = vand.u32 %v1239, 4294901760
    %v1241 = vsub.f32 %v1239, %v1240
    %v1242 = vand.u32 %v1241, 4294901760
    %1243 = vmatpush.msra.mxu0 %v1242
    %v1244 = vand.u32 %v70, 4294901760
    %v1245 = vsub.f32 %v70, %v1244
    %v1246 = vand.u32 %v1245, 4294901760
    %v1247 = vsub.f32 %v1245, %v1246
    %v1248 = vand.u32 %v1247, 4294901760
    %1249 = vmatpush.msra.mxu0 %v1248
    %v1250 = vand.u32 %v21, 4294901760
    %1251 = vmatmul.f32.gmra.mxu0 %v1250
    %v1252 = vpop.f32.mrf.mxu0
    %v1253 = vadd.f32 %v1152, %v1252
    %1254 = vdwg.mxu0
    %v1255 = vand.u32 %v85, 4294901760
    %v1256 = vsub.f32 %v85, %v1255
    %1257 = vmatpush.msra.mxu0 %v1256
    %v1258 = vand.u32 %v84, 4294901760
    %v1259 = vsub.f32 %v84, %v1258
    %1260 = vmatpush.msra.mxu0 %v1259
    %v1261 = vand.u32 %v83, 4294901760
    %v1262 = vsub.f32 %v83, %v1261
    %1263 = vmatpush.msra.mxu0 %v1262
    %v1264 = vand.u32 %v82, 4294901760
    %v1265 = vsub.f32 %v82, %v1264
    %1266 = vmatpush.msra.mxu0 %v1265
    %v1267 = vand.u32 %v81, 4294901760
    %v1268 = vsub.f32 %v81, %v1267
    %1269 = vmatpush.msra.mxu0 %v1268
    %v1270 = vand.u32 %v80, 4294901760
    %v1271 = vsub.f32 %v80, %v1270
    %1272 = vmatpush.msra.mxu0 %v1271
    %v1273 = vand.u32 %v79, 4294901760
    %v1274 = vsub.f32 %v79, %v1273
    %1275 = vmatpush.msra.mxu0 %v1274
    %v1276 = vand.u32 %v78, 4294901760
    %v1277 = vsub.f32 %v78, %v1276
    %1278 = vmatpush.msra.mxu0 %v1277
    %v1279 = vand.u32 %v77, 4294901760
    %v1280 = vsub.f32 %v77, %v1279
    %1281 = vmatpush.msra.mxu0 %v1280
    %v1282 = vand.u32 %v76, 4294901760
    %v1283 = vsub.f32 %v76, %v1282
    %1284 = vmatpush.msra.mxu0 %v1283
    %v1285 = vand.u32 %v75, 4294901760
    %v1286 = vsub.f32 %v75, %v1285
    %1287 = vmatpush.msra.mxu0 %v1286
    %v1288 = vand.u32 %v74, 4294901760
    %v1289 = vsub.f32 %v74, %v1288
    %1290 = vmatpush.msra.mxu0 %v1289
    %v1291 = vand.u32 %v73, 4294901760
    %v1292 = vsub.f32 %v73, %v1291
    %1293 = vmatpush.msra.mxu0 %v1292
    %v1294 = vand.u32 %v72, 4294901760
    %v1295 = vsub.f32 %v72, %v1294
    %1296 = vmatpush.msra.mxu0 %v1295
    %v1297 = vand.u32 %v71, 4294901760
    %v1298 = vsub.f32 %v71, %v1297
    %1299 = vmatpush.msra.mxu0 %v1298
    %v1300 = vand.u32 %v70, 4294901760
    %v1301 = vsub.f32 %v70, %v1300
    %1302 = vmatpush.msra.mxu0 %v1301
    %v1303 = vand.u32 %v21, 4294901760
    %v1304 = vsub.f32 %v21, %v1303
    %1305 = vmatmul.f32.gmra.mxu0 %v1304
    %v1306 = vpop.f32.mrf.mxu0
    %v1307 = vadd.f32 %v1253, %v1306
    %1308 = vdwg.mxu0
    %v1309 = vand.u32 %v85, 4294901760
    %1310 = vmatpush.msra.mxu0 %v1309
    %v1311 = vand.u32 %v84, 4294901760
    %1312 = vmatpush.msra.mxu0 %v1311
    %v1313 = vand.u32 %v83, 4294901760
    %1314 = vmatpush.msra.mxu0 %v1313
    %v1315 = vand.u32 %v82, 4294901760
    %1316 = vmatpush.msra.mxu0 %v1315
    %v1317 = vand.u32 %v81, 4294901760
    %1318 = vmatpush.msra.mxu0 %v1317
    %v1319 = vand.u32 %v80, 4294901760
    %1320 = vmatpush.msra.mxu0 %v1319
    %v1321 = vand.u32 %v79, 4294901760
    %1322 = vmatpush.msra.mxu0 %v1321
    %v1323 = vand.u32 %v78, 4294901760
    %1324 = vmatpush.msra.mxu0 %v1323
    %v1325 = vand.u32 %v77, 4294901760
    %1326 = vmatpush.msra.mxu0 %v1325
    %v1327 = vand.u32 %v76, 4294901760
    %1328 = vmatpush.msra.mxu0 %v1327
    %v1329 = vand.u32 %v75, 4294901760
    %1330 = vmatpush.msra.mxu0 %v1329
    %v1331 = vand.u32 %v74, 4294901760
    %1332 = vmatpush.msra.mxu0 %v1331
    %v1333 = vand.u32 %v73, 4294901760
    %1334 = vmatpush.msra.mxu0 %v1333
    %v1335 = vand.u32 %v72, 4294901760
    %1336 = vmatpush.msra.mxu0 %v1335
    %v1337 = vand.u32 %v71, 4294901760
    %1338 = vmatpush.msra.mxu0 %v1337
    %v1339 = vand.u32 %v70, 4294901760
    %1340 = vmatpush.msra.mxu0 %v1339
    %v1341 = vand.u32 %v21, 4294901760
    %v1342 = vsub.f32 %v21, %v1341
    %v1343 = vand.u32 %v1342, 4294901760
    %1344 = vmatmul.f32.gmra.mxu0 %v1343
    %v1345 = vpop.f32.mrf.mxu0
    %v1346 = vadd.f32 %v1307, %v1345
    %1347 = vdwg.mxu0
    %v1348 = vand.u32 %v85, 4294901760
    %v1349 = vsub.f32 %v85, %v1348
    %v1350 = vand.u32 %v1349, 4294901760
    %1351 = vmatpush.msra.mxu0 %v1350
    %v1352 = vand.u32 %v84, 4294901760
    %v1353 = vsub.f32 %v84, %v1352
    %v1354 = vand.u32 %v1353, 4294901760
    %1355 = vmatpush.msra.mxu0 %v1354
    %v1356 = vand.u32 %v83, 4294901760
    %v1357 = vsub.f32 %v83, %v1356
    %v1358 = vand.u32 %v1357, 4294901760
    %1359 = vmatpush.msra.mxu0 %v1358
    %v1360 = vand.u32 %v82, 4294901760
    %v1361 = vsub.f32 %v82, %v1360
    %v1362 = vand.u32 %v1361, 4294901760
    %1363 = vmatpush.msra.mxu0 %v1362
    %v1364 = vand.u32 %v81, 4294901760
    %v1365 = vsub.f32 %v81, %v1364
    %v1366 = vand.u32 %v1365, 4294901760
    %1367 = vmatpush.msra.mxu0 %v1366
    %v1368 = vand.u32 %v80, 4294901760
    %v1369 = vsub.f32 %v80, %v1368
    %v1370 = vand.u32 %v1369, 4294901760
    %1371 = vmatpush.msra.mxu0 %v1370
    %v1372 = vand.u32 %v79, 4294901760
    %v1373 = vsub.f32 %v79, %v1372
    %v1374 = vand.u32 %v1373, 4294901760
    %1375 = vmatpush.msra.mxu0 %v1374
    %v1376 = vand.u32 %v78, 4294901760
    %v1377 = vsub.f32 %v78, %v1376
    %v1378 = vand.u32 %v1377, 4294901760
    %1379 = vmatpush.msra.mxu0 %v1378
    %v1380 = vand.u32 %v77, 4294901760
    %v1381 = vsub.f32 %v77, %v1380
    %v1382 = vand.u32 %v1381, 4294901760
    %1383 = vmatpush.msra.mxu0 %v1382
    %v1384 = vand.u32 %v76, 4294901760
    %v1385 = vsub.f32 %v76, %v1384
    %v1386 = vand.u32 %v1385, 4294901760
    %1387 = vmatpush.msra.mxu0 %v1386
    %v1388 = vand.u32 %v75, 4294901760
    %v1389 = vsub.f32 %v75, %v1388
    %v1390 = vand.u32 %v1389, 4294901760
    %1391 = vmatpush.msra.mxu0 %v1390
    %v1392 = vand.u32 %v74, 4294901760
    %v1393 = vsub.f32 %v74, %v1392
    %v1394 = vand.u32 %v1393, 4294901760
    %1395 = vmatpush.msra.mxu0 %v1394
    %v1396 = vand.u32 %v73, 4294901760
    %v1397 = vsub.f32 %v73, %v1396
    %v1398 = vand.u32 %v1397, 4294901760
    %1399 = vmatpush.msra.mxu0 %v1398
    %v1400 = vand.u32 %v72, 4294901760
    %v1401 = vsub.f32 %v72, %v1400
    %v1402 = vand.u32 %v1401, 4294901760
    %1403 = vmatpush.msra.mxu0 %v1402
    %v1404 = vand.u32 %v71, 4294901760
    %v1405 = vsub.f32 %v71, %v1404
    %v1406 = vand.u32 %v1405, 4294901760
    %1407 = vmatpush.msra.mxu0 %v1406
    %v1408 = vand.u32 %v70, 4294901760
    %v1409 = vsub.f32 %v70, %v1408
    %v1410 = vand.u32 %v1409, 4294901760
    %1411 = vmatpush.msra.mxu0 %v1410
    %v1412 = vand.u32 %v21, 4294901760
    %1413 = vmatmul.f32.gmra.mxu0 %v1412
    %v1414 = vpop.f32.mrf.mxu0
    %v1415 = vadd.f32 %v1346, %v1414
    %1416 = vdwg.mxu0
    %v1417 = vand.u32 %v85, 4294901760
    %1418 = vmatpush.msra.mxu0 %v1417
    %v1419 = vand.u32 %v84, 4294901760
    %1420 = vmatpush.msra.mxu0 %v1419
    %v1421 = vand.u32 %v83, 4294901760
    %1422 = vmatpush.msra.mxu0 %v1421
    %v1423 = vand.u32 %v82, 4294901760
    %1424 = vmatpush.msra.mxu0 %v1423
    %v1425 = vand.u32 %v81, 4294901760
    %1426 = vmatpush.msra.mxu0 %v1425
    %v1427 = vand.u32 %v80, 4294901760
    %1428 = vmatpush.msra.mxu0 %v1427
    %v1429 = vand.u32 %v79, 4294901760
    %1430 = vmatpush.msra.mxu0 %v1429
    %v1431 = vand.u32 %v78, 4294901760
    %1432 = vmatpush.msra.mxu0 %v1431
    %v1433 = vand.u32 %v77, 4294901760
    %1434 = vmatpush.msra.mxu0 %v1433
    %v1435 = vand.u32 %v76, 4294901760
    %1436 = vmatpush.msra.mxu0 %v1435
    %v1437 = vand.u32 %v75, 4294901760
    %1438 = vmatpush.msra.mxu0 %v1437
    %v1439 = vand.u32 %v74, 4294901760
    %1440 = vmatpush.msra.mxu0 %v1439
    %v1441 = vand.u32 %v73, 4294901760
    %1442 = vmatpush.msra.mxu0 %v1441
    %v1443 = vand.u32 %v72, 4294901760
    %1444 = vmatpush.msra.mxu0 %v1443
    %v1445 = vand.u32 %v71, 4294901760
    %1446 = vmatpush.msra.mxu0 %v1445
    %v1447 = vand.u32 %v70, 4294901760
    %1448 = vmatpush.msra.mxu0 %v1447
    %v1449 = vand.u32 %v21, 4294901760
    %1450 = vmatmul.f32.gmra.mxu0 %v1449
    %v1451 = vpop.f32.mrf.mxu0
    %v1452 = vadd.f32 %v1415, %v1451
    %1453 = vdwg.mxu0
    %v1454 = vtanh.pop %v1452
    %vm1455 = vcmask 130048
    %1456 = vst.msk [vmem:[#allocation2] sm:$0xff] %vm1455, %v1454
    %v1457 = vlaneseq
    %v1458 = vshrl.u32 %v1457, 7
    %s1459 = smul.u32 0, 8
    %v1460 = vstv %s1459
    %v1461 = vadd.s32 %v1458, %v1460
    %vm1462 = vcmp.lt.s32.totalorder %v1461, 4
    %v1463 = vsel %vm1462, %v1454, 0.0
    %v1464 = vsel %vm1455, %v1463, 0.0
    %1465 = vadd.xlane.f32.xlu0 %v1464
    %v1466 = vpop.xlane.xlu0 %1465
    %v1467 = vrot.slane %v1466, 4
    %v1468 = vadd.f32 %v1466, %v1467
    %v1469 = vrot.slane %v1468, 2
    %v1470 = vadd.f32 %v1468, %v1469
    %v1471 = vrot.slane %v1470, 1
    %v1472 = vadd.f32 %v1470, %v1471
    %s1473 = vtos %v1472
    %v1474 = vmul.f32 %v1463, %v1463
    %v1475 = vsel %vm1455, %v1474, 0.0
    %1476 = vadd.xlane.f32.xlu0 %v1475
    %v1477 = vpop.xlane.xlu0 %1476
    %v1478 = vrot.slane %v1477, 4
    %v1479 = vadd.f32 %v1477, %v1478
    %v1480 = vrot.slane %v1479, 2
    %v1481 = vadd.f32 %v1479, %v1480
    %v1482 = vrot.slane %v1481, 1
    %v1483 = vadd.f32 %v1481, %v1482
    %s1484 = vtos %v1483
    %vm1485 = vcmp.eq.s32.totalorder %v1458, 0
    %v1486 = vstv %s1473
    %v1487 = vstv %s1484
    %v1488 = vsel %vm1485, %v1486, %v1487
    %1489 = vst [vmem:[#allocation4] sm:$0x3] %v1488
    // Predicated region
    $region14: #{tpu_custom_call.1} parent=1 // pred_check
      _
    $region15: #{tpu_custom_call.1} parent=1 // pred_check_branch
      %1491 = sbr.rel (0) target = $region17
    $region16: #{tpu_custom_call.1} parent=1 // pred_region
      %1493 = vsyncadd [#allocation3], 0
      %s1495 = sshll.u32 [#allocation2], 4
      %s1496 = int_to_ptr.vmem [resolvable:$true] %s1495
      %s1497 = sshll.u32 %s3, 4
      %s1498 = int_to_ptr.hbm [resolvable:$true] %s1497
      %1500 = dma.vmem_to_hbm [thread:$0]  %s1496, 128, %s1498, [#allocation3]
    $region17: #{tpu_custom_call.1} parent=1 // pred_fallthru
      _
    // Predicated region
    $region18: #{tpu_custom_call.1} parent=1 // pred_check
      _
    $region19: #{tpu_custom_call.1} parent=1 // pred_check_branch
      %1502 = sbr.rel (0) target = $region21
    $region20: #{tpu_custom_call.1} parent=1 // pred_region
      %1504 = vsyncadd [#allocation5], 0
      %s1506 = sshll.u32 [#allocation4], 4
      %s1507 = int_to_ptr.vmem [resolvable:$true] %s1506
      %s1508 = sshll.u32 %s4, 4
      %s1509 = int_to_ptr.hbm [resolvable:$true] %s1508
      %1511 = dma.vmem_to_hbm [thread:$0]  %s1507, 32, %s1509, [#allocation5]
    $region21: #{tpu_custom_call.1} parent=1 // pred_fallthru
      _
    // Predicated region
    $region22: #{tpu_custom_call.1} parent=1 // pred_check
      _
    $region23: #{tpu_custom_call.1} parent=1 // pred_check_branch
      %1513 = sbr.rel (0) target = $region25
    $region24: #{tpu_custom_call.1} parent=1 // pred_region
      %1515 = dma.done [#allocation3], 128
    $region25: #{tpu_custom_call.1} parent=1 // pred_fallthru
      _
    // Predicated region
    $region26: #{tpu_custom_call.1} parent=1 // pred_check
      _
    $region27: #{tpu_custom_call.1} parent=1 // pred_check_branch
      %1517 = sbr.rel (0) target = $region29
    $region28: #{tpu_custom_call.1} parent=1 // pred_region
      %1519 = dma.done [#allocation5], 32
    $region29: #{tpu_custom_call.1} parent=1 // pred_fallthru
      _
    %1520 = vsyncpa [#allocation3], 1
    %1521 = vsyncpa [#allocation5], 1

</llo_original>
